<compile_context>
chip_gen: v5e
topology: v5e:2x2
jax: 0.10.0
libtpu: 0.0.40
codegen_flags: <defaults>
</compile_context>

<pallas_src>
import functools

import jax
import jax.numpy as jnp
from jax.experimental import pallas as pl
from jax.experimental.pallas import tpu as pltpu

EPS = 1e-5  # BatchNorm3d default eps


# ---------------- fused Pallas kernel ----------------

def _fused_kernel(x_ref, wpa_ref, wb_ref, wc_ref, spa_ref, bpa_ref,
                  sb_ref, bb_ref, sc_ref, bc_ref, o_ref, ap_ref,
                  *, D, H, W, c_b, c_out):
    Lb = W * c_b    # packed lane width of bottleneck activations (128 here)
    Lo = W * c_out  # packed lane width of the block output       (128 here)

    x = x_ref[0]    # (D*H, W*c_in)  lane-packed channels-last input

    # proj (1x1x1 conv + BN, no act) and f.a (1x1x1 conv + BN + ReLU):
    # one matmul against the concatenated block-diagonal weights.
    y = jnp.dot(x, wpa_ref[...], preferred_element_type=jnp.float32)
    y = y * spa_ref[...] + bpa_ref[...]
    proj = y[:, :Lo]
    a = jnp.maximum(y[:, Lo:Lo + Lb], 0.0)

    # f.b: 3x3x3 conv (stride 1, pad 1, groups=1) + BN + ReLU.
    # kw offsets are folded into block-banded (Lb, Lb) weights; (kd, kh)
    # offsets become row shifts on a zero-initialized VMEM halo buffer.
    ap_ref[...] = jnp.zeros_like(ap_ref)
    ap_ref[1:1 + D, 1:1 + H, :] = a.reshape(D, H, Lb)

    acc = jnp.zeros((D * H, Lb), jnp.float32)
    for kd in range(3):
        for kh in range(3):
            xs = ap_ref[kd:kd + D, kh:kh + H, :].reshape(D * H, Lb)
            acc = acc + jnp.dot(xs, wb_ref[kd * 3 + kh],
                                preferred_element_type=jnp.float32)
    b = jnp.maximum(acc * sb_ref[...] + bb_ref[...], 0.0)

    # f.c: 1x1x1 conv + BN (block-diagonal weights), residual add, final ReLU.
    c = jnp.dot(b, wc_ref[...], preferred_element_type=jnp.float32)
    c = c * sc_ref[...] + bc_ref[...]
    o_ref[0] = jnp.maximum(proj + c, 0.0).astype(o_ref.dtype)


def res_bottleneck_block(x_ncdhw, pp):
    """Fused forward. x in PyTorch NCDHW layout; pp from pack_params()."""
    N, c_in, D, H, W = x_ncdhw.shape
    c_b = pp['wc'].shape[0] // W
    c_out = pp['wc'].shape[1] // W
    Lb, Lo = W * c_b, W * c_out

    # Layout adapter NCDHW -> packed channels-last (N, D*H, W*C). In a full
    # channels-last network the block would consume/produce packed activations
    # directly and these two transposes disappear.
    xp = jnp.transpose(x_ncdhw, (0, 2, 3, 4, 1)).reshape(N, D * H, W * c_in)

    kern = functools.partial(_fused_kernel, D=D, H=H, W=W, c_b=c_b, c_out=c_out)
    yp = pl.pallas_call(
        kern,
        out_shape=jax.ShapeDtypeStruct((N, D * H, Lo), jnp.float32),
        grid=(N,),
        in_specs=[
            pl.BlockSpec((1, D * H, W * c_in), lambda n: (n, 0, 0)),
            pl.BlockSpec(pp['wpa'].shape, lambda n: (0, 0)),
            pl.BlockSpec(pp['wb'].shape, lambda n: (0, 0, 0)),
            pl.BlockSpec(pp['wc'].shape, lambda n: (0, 0)),
            pl.BlockSpec(pp['spa'].shape, lambda n: (0, 0)),
            pl.BlockSpec(pp['bpa'].shape, lambda n: (0, 0)),
            pl.BlockSpec(pp['sb'].shape, lambda n: (0, 0)),
            pl.BlockSpec(pp['bb'].shape, lambda n: (0, 0)),
            pl.BlockSpec(pp['sc'].shape, lambda n: (0, 0)),
            pl.BlockSpec(pp['bc'].shape, lambda n: (0, 0)),
        ],
        out_specs=pl.BlockSpec((1, D * H, Lo), lambda n: (n, 0, 0)),
        scratch_shapes=[pltpu.VMEM((D + 2, H + 2, Lb), jnp.float32)],
        compiler_params=pltpu.CompilerParams(
            dimension_semantics=("parallel",)),  # N=2 steps -> both v7x TCs busy
    )(xp, pp['wpa'], pp['wb'], pp['wc'], pp['spa'], pp['bpa'],
      pp['sb'], pp['bb'], pp['sc'], pp['bc'])

    y = yp.reshape(N, D, H, W, c_out)
    return jnp.transpose(y, (0, 4, 1, 2, 3))  # back to NCDHW


# ---------------- parameter setup & packing ----------------

def fold_bn(gamma, beta, mean, var):
    scale = gamma / jnp.sqrt(var + EPS)
    bias = beta - mean * scale
    return scale, bias


def init_params(key, width_in, width_out, w_b):
    ks = jax.random.split(key, 8)

    def bn(k, c):
        k1, k2, k3, k4 = jax.random.split(k, 4)
        gamma = jax.random.uniform(k1, (c,), jnp.float32, 0.5, 1.5)
        beta = jax.random.normal(k2, (c,), jnp.float32) * 0.1
        mean = jax.random.normal(k3, (c,), jnp.float32) * 0.1
        var = jax.random.uniform(k4, (c,), jnp.float32, 0.5, 1.5)
        return fold_bn(gamma, beta, mean, var)

    p = {}
    # proj: 1x1x1 conv width_in -> width_out, BN, no activation
    p['w_proj'] = jax.random.normal(ks[0], (width_in, width_out), jnp.float32) * 0.2
    p['s_proj'], p['b_proj'] = bn(ks[1], width_out)
    # f.a: 1x1x1 conv width_in -> w_b, BN, ReLU
    p['w_a'] = jax.random.normal(ks[2], (width_in, w_b), jnp.float32) * 0.2
    p['s_a'], p['b_a'] = bn(ks[3], w_b)
    # f.b: 3x3x3 conv w_b -> w_b (groups=1), BN, ReLU ; taps (27, Cin, Cout)
    p['w_b'] = jax.random.normal(ks[4], (27, w_b, w_b), jnp.float32) * 0.1
    p['s_b'], p['b_b'] = bn(ks[5], w_b)
    # f.c: 1x1x1 conv w_b -> width_out, BN, no activation
    p['w_c'] = jax.random.normal(ks[6], (w_b, width_out), jnp.float32) * 0.2
    p['s_c'], p['b_c'] = bn(ks[7], width_out)
    return p


def pack_params(p, W):
    """One-time weight packing into the lane-dense (W,C) layout.

    - 1x1x1 convs become block-diagonal (W*cin, W*cout) matrices (kron with I_W).
    - The 3x3x3 conv becomes 9 block-banded (W*c_b, W*c_b) matrices: the kw
      offset is a shifted-identity kron factor (zero band outside [0,W) handles
      the W-boundary padding).
    - BN scale/bias are tiled W times to match the packed lane order w*C + c.
    """
    c_b = p['w_a'].shape[1]
    eyeW = jnp.eye(W, dtype=jnp.float32)

    wpa = jnp.concatenate([jnp.kron(eyeW, p['w_proj']),
                           jnp.kron(eyeW, p['w_a'])], axis=1)
    spa = jnp.concatenate([jnp.tile(p['s_proj'], W), jnp.tile(p['s_a'], W)])
    bpa = jnp.concatenate([jnp.tile(p['b_proj'], W), jnp.tile(p['b_a'], W)])

    w3 = p['w_b'].reshape(3, 3, 3, c_b, c_b)          # (kd, kh, kw, ci, co)
    shifts = jnp.stack([jnp.eye(W, k=1 - kw, dtype=jnp.float32) for kw in range(3)])
    # band[(kd,kh), wi*ci + i, wo*co + o] = sum_kw shifts[kw, wi, wo] * w3[kd,kh,kw,i,o]
    wb = jnp.einsum('kab,dhkio->dhaibo', shifts, w3).reshape(9, W * c_b, W * c_b)

    wc = jnp.kron(eyeW, p['w_c'])

    return dict(
        wpa=wpa, spa=spa.reshape(1, -1), bpa=bpa.reshape(1, -1),
        wb=wb,
        sb=jnp.tile(p['s_b'], W).reshape(1, -1),
        bb=jnp.tile(p['b_b'], W).reshape(1, -1),
        wc=wc,
        sc=jnp.tile(p['s_c'], W).reshape(1, -1),
        bc=jnp.tile(p['b_c'], W).reshape(1, -1),
    )


# ---------------- pure-JAX reference ----------------

def ref_forward(x_ncdhw, p):
    x = jnp.transpose(x_ncdhw, (0, 2, 3, 4, 1))

    def pw(v, w, s, b, relu):
        y = jnp.einsum('ndhwc,co->ndhwo', v, w) * s + b
        return jnp.maximum(y, 0.0) if relu else y

    proj = pw(x, p['w_proj'], p['s_proj'], p['b_proj'], False)
    a = pw(x, p['w_a'], p['s_a'], p['b_a'], True)
    wb_c = p['w_a'].shape[1]
    w3 = p['w_b'].reshape(3, 3, 3, wb_c, wb_c)
    bconv = jax.lax.conv_general_dilated(
        a, w3, window_strides=(1, 1, 1), padding='SAME',
        dimension_numbers=('NDHWC', 'DHWIO', 'NDHWC'))
    b = jnp.maximum(bconv * p['s_b'] + p['b_b'], 0.0)
    c = pw(b, p['w_c'], p['s_c'], p['b_c'], False)
    y = jnp.maximum(proj + c, 0.0)
    return jnp.transpose(y, (0, 4, 1, 2, 3))


if __name__ == "__main__":
    key = jax.random.PRNGKey(0)
    kx, kp = jax.random.split(key)

    N, Cin, D, H, W = 2, 8, 8, 8, 8
    width_out = 16
    bottleneck_multiplier = 1.0
    w_b_width = int(round(width_out * bottleneck_multiplier))

    x = jax.random.normal(kx, (N, Cin, D, H, W), jnp.float32)
    params = init_params(kp, Cin, width_out, w_b_width)

    # One-time weight packing (would be done at model-load time in practice).
    pp = jax.tree_util.tree_map(jax.device_put, pack_params(params, W))

    out = jax.jit(res_bottleneck_block)(x, pp)
    out = jax.block_until_ready(out)

    ref = ref_forward(x, params)
    assert out.shape == (N, width_out, D, H, W), out.shape
    max_err = float(jnp.max(jnp.abs(out - ref)))
    assert jnp.allclose(out, ref, atol=1e-3, rtol=1e-3), max_err

    print("KERNEL_OK")
</pallas_src>

<mosaic_0001>
module attributes {stable_mosaic.version = 11 : i64} {
  func.func @_fused_kernel(%arg0: i32, %arg1: memref<1x64x64xf32, #tpu.memory_space<vmem>>, %arg2: memref<64x256xf32, #tpu.memory_space<vmem>>, %arg3: memref<9x128x128xf32, #tpu.memory_space<vmem>>, %arg4: memref<128x128xf32, #tpu.memory_space<vmem>>, %arg5: memref<1x256xf32, #tpu.memory_space<vmem>>, %arg6: memref<1x256xf32, #tpu.memory_space<vmem>>, %arg7: memref<1x128xf32, #tpu.memory_space<vmem>>, %arg8: memref<1x128xf32, #tpu.memory_space<vmem>>, %arg9: memref<1x128xf32, #tpu.memory_space<vmem>>, %arg10: memref<1x128xf32, #tpu.memory_space<vmem>>, %arg11: memref<1x64x128xf32, #tpu.memory_space<vmem>>, %arg12: memref<10x10x128xf32, #tpu.memory_space<vmem>>) attributes {dimension_semantics = [#tpu.dimension_semantics<parallel>], iteration_bounds = array<i64: 2>, scalar_prefetch = 0 : i64, scratch_operands = 1 : i64, tpu.core_type = #tpu.core_type<tc>, window_params = [{transform_indices = @transform_0, window_bounds = array<i64: 1, 64, 64>}, {pipeline_mode = #tpu.pipeline_mode<synchronous>, transform_indices = @transform_1, window_bounds = array<i64: 64, 256>}, {pipeline_mode = #tpu.pipeline_mode<synchronous>, transform_indices = @transform_2, window_bounds = array<i64: 9, 128, 128>}, {pipeline_mode = #tpu.pipeline_mode<synchronous>, transform_indices = @transform_3, window_bounds = array<i64: 128, 128>}, {pipeline_mode = #tpu.pipeline_mode<synchronous>, transform_indices = @transform_4, window_bounds = array<i64: 1, 256>}, {pipeline_mode = #tpu.pipeline_mode<synchronous>, transform_indices = @transform_5, window_bounds = array<i64: 1, 256>}, {pipeline_mode = #tpu.pipeline_mode<synchronous>, transform_indices = @transform_6, window_bounds = array<i64: 1, 128>}, {pipeline_mode = #tpu.pipeline_mode<synchronous>, transform_indices = @transform_7, window_bounds = array<i64: 1, 128>}, {pipeline_mode = #tpu.pipeline_mode<synchronous>, transform_indices = @transform_8, window_bounds = array<i64: 1, 128>}, {pipeline_mode = #tpu.pipeline_mode<synchronous>, transform_indices = @transform_9, window_bounds = array<i64: 1, 128>}, {transform_indices = @transform_10, window_bounds = array<i64: 1, 64, 128>}]} {
    %c0 = arith.constant 0 : index
    %c0_0 = arith.constant 0 : index
    %c0_1 = arith.constant 0 : index
    %0 = vector.load %arg1[%c0, %c0_0, %c0_1] : memref<1x64x64xf32, #tpu.memory_space<vmem>>, vector<1x64x64xf32>
    %1 = vector.shape_cast %0 : vector<1x64x64xf32> to vector<64x64xf32>
    %c0_2 = arith.constant 0 : index
    %c0_3 = arith.constant 0 : index
    %2 = vector.load %arg2[%c0_2, %c0_3] : memref<64x256xf32, #tpu.memory_space<vmem>>, vector<64x256xf32>
    %cst = arith.constant dense<0.000000e+00> : vector<64x256xf32>
    %3 = tpu.matmul %1, %2, %cst {dimension_numbers = #tpu.dot_dimension_numbers<[1], [0], [0], [1], [0, 0, 1, 1], [], []>} : vector<64x64xf32>, vector<64x256xf32>, vector<64x256xf32> -> vector<64x256xf32>
    %c0_4 = arith.constant 0 : index
    %c0_5 = arith.constant 0 : index
    %4 = vector.load %arg5[%c0_4, %c0_5] : memref<1x256xf32, #tpu.memory_space<vmem>>, vector<1x256xf32>
    %5 = vector.broadcast %4 : vector<1x256xf32> to vector<64x256xf32>
    %6 = arith.mulf %3, %5 : vector<64x256xf32>
    %c0_6 = arith.constant 0 : index
    %c0_7 = arith.constant 0 : index
    %7 = vector.load %arg6[%c0_6, %c0_7] : memref<1x256xf32, #tpu.memory_space<vmem>>, vector<1x256xf32>
    %8 = vector.broadcast %7 : vector<1x256xf32> to vector<64x256xf32>
    %9 = arith.addf %6, %8 : vector<64x256xf32>
    %10 = vector.extract_strided_slice %9 {offsets = [0, 0], sizes = [64, 128], strides = [1, 1]} : vector<64x256xf32> to vector<64x128xf32>
    %11 = vector.extract_strided_slice %9 {offsets = [0, 128], sizes = [64, 128], strides = [1, 1]} : vector<64x256xf32> to vector<64x128xf32>
    %cst_8 = arith.constant 0.000000e+00 : f32
    %12 = vector.broadcast %cst_8 : f32 to vector<64x128xf32>
    %13 = arith.maximumf %11, %12 : vector<64x128xf32>
    %cst_9 = arith.constant 0.000000e+00 : f32
    %14 = vector.broadcast %cst_9 : f32 to vector<10x10x128xf32>
    %c0_10 = arith.constant 0 : index
    %c0_11 = arith.constant 0 : index
    %c0_12 = arith.constant 0 : index
    %15 = vector.load %arg12[%c0_10, %c0_11, %c0_12] : memref<10x10x128xf32, #tpu.memory_space<vmem>>, vector<10x10x128xf32>
    tpu.vector_store %arg12[%c0_10, %c0_11, %c0_12], %14 {strides = array<i32>} : memref<10x10x128xf32, #tpu.memory_space<vmem>>, vector<10x10x128xf32>,
    %16 = vector.shape_cast %13 : vector<64x128xf32> to vector<8x8x128xf32>
    %c1 = arith.constant 1 : index
    %c1_13 = arith.constant 1 : index
    %c0_14 = arith.constant 0 : index
    %17 = vector.load %arg12[%c1, %c1_13, %c0_14] : memref<10x10x128xf32, #tpu.memory_space<vmem>>, vector<8x8x128xf32>
    tpu.vector_store %arg12[%c1, %c1_13, %c0_14], %16 {strides = array<i32>} : memref<10x10x128xf32, #tpu.memory_space<vmem>>, vector<8x8x128xf32>,
    %cst_15 = arith.constant 0.000000e+00 : f32
    %18 = vector.broadcast %cst_15 : f32 to vector<64x128xf32>
    %c0_16 = arith.constant 0 : index
    %c0_17 = arith.constant 0 : index
    %c0_18 = arith.constant 0 : index
    %19 = vector.load %arg12[%c0_16, %c0_17, %c0_18] : memref<10x10x128xf32, #tpu.memory_space<vmem>>, vector<8x8x128xf32>
    %20 = vector.shape_cast %19 : vector<8x8x128xf32> to vector<64x128xf32>
    %c0_19 = arith.constant 0 : index
    %c0_20 = arith.constant 0 : index
    %c0_21 = arith.constant 0 : index
    %21 = vector.load %arg3[%c0_19, %c0_20, %c0_21] : memref<9x128x128xf32, #tpu.memory_space<vmem>>, vector<1x128x128xf32>
    %22 = vector.shape_cast %21 : vector<1x128x128xf32> to vector<128x128xf32>
    %cst_22 = arith.constant dense<0.000000e+00> : vector<64x128xf32>
    %23 = tpu.matmul %20, %22, %cst_22 {dimension_numbers = #tpu.dot_dimension_numbers<[1], [0], [0], [1], [0, 0, 1, 1], [], []>} : vector<64x128xf32>, vector<128x128xf32>, vector<64x128xf32> -> vector<64x128xf32>
    %24 = arith.addf %18, %23 : vector<64x128xf32>
    %c0_23 = arith.constant 0 : index
    %c1_24 = arith.constant 1 : index
    %c0_25 = arith.constant 0 : index
    %25 = vector.load %arg12[%c0_23, %c1_24, %c0_25] : memref<10x10x128xf32, #tpu.memory_space<vmem>>, vector<8x8x128xf32>
    %26 = vector.shape_cast %25 : vector<8x8x128xf32> to vector<64x128xf32>
    %c1_26 = arith.constant 1 : index
    %c0_27 = arith.constant 0 : index
    %c0_28 = arith.constant 0 : index
    %27 = vector.load %arg3[%c1_26, %c0_27, %c0_28] : memref<9x128x128xf32, #tpu.memory_space<vmem>>, vector<1x128x128xf32>
    %28 = vector.shape_cast %27 : vector<1x128x128xf32> to vector<128x128xf32>
    %cst_29 = arith.constant dense<0.000000e+00> : vector<64x128xf32>
    %29 = tpu.matmul %26, %28, %cst_29 {dimension_numbers = #tpu.dot_dimension_numbers<[1], [0], [0], [1], [0, 0, 1, 1], [], []>} : vector<64x128xf32>, vector<128x128xf32>, vector<64x128xf32> -> vector<64x128xf32>
    %30 = arith.addf %24, %29 : vector<64x128xf32>
    %c0_30 = arith.constant 0 : index
    %c2 = arith.constant 2 : index
    %c0_31 = arith.constant 0 : index
    %31 = vector.load %arg12[%c0_30, %c2, %c0_31] : memref<10x10x128xf32, #tpu.memory_space<vmem>>, vector<8x8x128xf32>
    %32 = vector.shape_cast %31 : vector<8x8x128xf32> to vector<64x128xf32>
    %c2_32 = arith.constant 2 : index
    %c0_33 = arith.constant 0 : index
    %c0_34 = arith.constant 0 : index
    %33 = vector.load %arg3[%c2_32, %c0_33, %c0_34] : memref<9x128x128xf32, #tpu.memory_space<vmem>>, vector<1x128x128xf32>
    %34 = vector.shape_cast %33 : vector<1x128x128xf32> to vector<128x128xf32>
    %cst_35 = arith.constant dense<0.000000e+00> : vector<64x128xf32>
    %35 = tpu.matmul %32, %34, %cst_35 {dimension_numbers = #tpu.dot_dimension_numbers<[1], [0], [0], [1], [0, 0, 1, 1], [], []>} : vector<64x128xf32>, vector<128x128xf32>, vector<64x128xf32> -> vector<64x128xf32>
    %36 = arith.addf %30, %35 : vector<64x128xf32>
    %c1_36 = arith.constant 1 : index
    %c0_37 = arith.constant 0 : index
    %c0_38 = arith.constant 0 : index
    %37 = vector.load %arg12[%c1_36, %c0_37, %c0_38] : memref<10x10x128xf32, #tpu.memory_space<vmem>>, vector<8x8x128xf32>
    %38 = vector.shape_cast %37 : vector<8x8x128xf32> to vector<64x128xf32>
    %c3 = arith.constant 3 : index
    %c0_39 = arith.constant 0 : index
    %c0_40 = arith.constant 0 : index
    %39 = vector.load %arg3[%c3, %c0_39, %c0_40] : memref<9x128x128xf32, #tpu.memory_space<vmem>>, vector<1x128x128xf32>
    %40 = vector.shape_cast %39 : vector<1x128x128xf32> to vector<128x128xf32>
    %cst_41 = arith.constant dense<0.000000e+00> : vector<64x128xf32>
    %41 = tpu.matmul %38, %40, %cst_41 {dimension_numbers = #tpu.dot_dimension_numbers<[1], [0], [0], [1], [0, 0, 1, 1], [], []>} : vector<64x128xf32>, vector<128x128xf32>, vector<64x128xf32> -> vector<64x128xf32>
    %42 = arith.addf %36, %41 : vector<64x128xf32>
    %c1_42 = arith.constant 1 : index
    %c1_43 = arith.constant 1 : index
    %c0_44 = arith.constant 0 : index
    %43 = vector.load %arg12[%c1_42, %c1_43, %c0_44] : memref<10x10x128xf32, #tpu.memory_space<vmem>>, vector<8x8x128xf32>
    %44 = vector.shape_cast %43 : vector<8x8x128xf32> to vector<64x128xf32>
    %c4 = arith.constant 4 : index
    %c0_45 = arith.constant 0 : index
    %c0_46 = arith.constant 0 : index
    %45 = vector.load %arg3[%c4, %c0_45, %c0_46] : memref<9x128x128xf32, #tpu.memory_space<vmem>>, vector<1x128x128xf32>
    %46 = vector.shape_cast %45 : vector<1x128x128xf32> to vector<128x128xf32>
    %cst_47 = arith.constant dense<0.000000e+00> : vector<64x128xf32>
    %47 = tpu.matmul %44, %46, %cst_47 {dimension_numbers = #tpu.dot_dimension_numbers<[1], [0], [0], [1], [0, 0, 1, 1], [], []>} : vector<64x128xf32>, vector<128x128xf32>, vector<64x128xf32> -> vector<64x128xf32>
    %48 = arith.addf %42, %47 : vector<64x128xf32>
    %c1_48 = arith.constant 1 : index
    %c2_49 = arith.constant 2 : index
    %c0_50 = arith.constant 0 : index
    %49 = vector.load %arg12[%c1_48, %c2_49, %c0_50] : memref<10x10x128xf32, #tpu.memory_space<vmem>>, vector<8x8x128xf32>
    %50 = vector.shape_cast %49 : vector<8x8x128xf32> to vector<64x128xf32>
    %c5 = arith.constant 5 : index
    %c0_51 = arith.constant 0 : index
    %c0_52 = arith.constant 0 : index
    %51 = vector.load %arg3[%c5, %c0_51, %c0_52] : memref<9x128x128xf32, #tpu.memory_space<vmem>>, vector<1x128x128xf32>
    %52 = vector.shape_cast %51 : vector<1x128x128xf32> to vector<128x128xf32>
    %cst_53 = arith.constant dense<0.000000e+00> : vector<64x128xf32>
    %53 = tpu.matmul %50, %52, %cst_53 {dimension_numbers = #tpu.dot_dimension_numbers<[1], [0], [0], [1], [0, 0, 1, 1], [], []>} : vector<64x128xf32>, vector<128x128xf32>, vector<64x128xf32> -> vector<64x128xf32>
    %54 = arith.addf %48, %53 : vector<64x128xf32>
    %c2_54 = arith.constant 2 : index
    %c0_55 = arith.constant 0 : index
    %c0_56 = arith.constant 0 : index
    %55 = vector.load %arg12[%c2_54, %c0_55, %c0_56] : memref<10x10x128xf32, #tpu.memory_space<vmem>>, vector<8x8x128xf32>
    %56 = vector.shape_cast %55 : vector<8x8x128xf32> to vector<64x128xf32>
    %c6 = arith.constant 6 : index
    %c0_57 = arith.constant 0 : index
    %c0_58 = arith.constant 0 : index
    %57 = vector.load %arg3[%c6, %c0_57, %c0_58] : memref<9x128x128xf32, #tpu.memory_space<vmem>>, vector<1x128x128xf32>
    %58 = vector.shape_cast %57 : vector<1x128x128xf32> to vector<128x128xf32>
    %cst_59 = arith.constant dense<0.000000e+00> : vector<64x128xf32>
    %59 = tpu.matmul %56, %58, %cst_59 {dimension_numbers = #tpu.dot_dimension_numbers<[1], [0], [0], [1], [0, 0, 1, 1], [], []>} : vector<64x128xf32>, vector<128x128xf32>, vector<64x128xf32> -> vector<64x128xf32>
    %60 = arith.addf %54, %59 : vector<64x128xf32>
    %c2_60 = arith.constant 2 : index
    %c1_61 = arith.constant 1 : index
    %c0_62 = arith.constant 0 : index
    %61 = vector.load %arg12[%c2_60, %c1_61, %c0_62] : memref<10x10x128xf32, #tpu.memory_space<vmem>>, vector<8x8x128xf32>
    %62 = vector.shape_cast %61 : vector<8x8x128xf32> to vector<64x128xf32>
    %c7 = arith.constant 7 : index
    %c0_63 = arith.constant 0 : index
    %c0_64 = arith.constant 0 : index
    %63 = vector.load %arg3[%c7, %c0_63, %c0_64] : memref<9x128x128xf32, #tpu.memory_space<vmem>>, vector<1x128x128xf32>
    %64 = vector.shape_cast %63 : vector<1x128x128xf32> to vector<128x128xf32>
    %cst_65 = arith.constant dense<0.000000e+00> : vector<64x128xf32>
    %65 = tpu.matmul %62, %64, %cst_65 {dimension_numbers = #tpu.dot_dimension_numbers<[1], [0], [0], [1], [0, 0, 1, 1], [], []>} : vector<64x128xf32>, vector<128x128xf32>, vector<64x128xf32> -> vector<64x128xf32>
    %66 = arith.addf %60, %65 : vector<64x128xf32>
    %c2_66 = arith.constant 2 : index
    %c2_67 = arith.constant 2 : index
    %c0_68 = arith.constant 0 : index
    %67 = vector.load %arg12[%c2_66, %c2_67, %c0_68] : memref<10x10x128xf32, #tpu.memory_space<vmem>>, vector<8x8x128xf32>
    %68 = vector.shape_cast %67 : vector<8x8x128xf32> to vector<64x128xf32>
    %c8 = arith.constant 8 : index
    %c0_69 = arith.constant 0 : index
    %c0_70 = arith.constant 0 : index
    %69 = vector.load %arg3[%c8, %c0_69, %c0_70] : memref<9x128x128xf32, #tpu.memory_space<vmem>>, vector<1x128x128xf32>
    %70 = vector.shape_cast %69 : vector<1x128x128xf32> to vector<128x128xf32>
    %cst_71 = arith.constant dense<0.000000e+00> : vector<64x128xf32>
    %71 = tpu.matmul %68, %70, %cst_71 {dimension_numbers = #tpu.dot_dimension_numbers<[1], [0], [0], [1], [0, 0, 1, 1], [], []>} : vector<64x128xf32>, vector<128x128xf32>, vector<64x128xf32> -> vector<64x128xf32>
    %72 = arith.addf %66, %71 : vector<64x128xf32>
    %c0_72 = arith.constant 0 : index
    %c0_73 = arith.constant 0 : index
    %73 = vector.load %arg7[%c0_72, %c0_73] : memref<1x128xf32, #tpu.memory_space<vmem>>, vector<1x128xf32>
    %74 = vector.broadcast %73 : vector<1x128xf32> to vector<64x128xf32>
    %75 = arith.mulf %72, %74 : vector<64x128xf32>
    %c0_74 = arith.constant 0 : index
    %c0_75 = arith.constant 0 : index
    %76 = vector.load %arg8[%c0_74, %c0_75] : memref<1x128xf32, #tpu.memory_space<vmem>>, vector<1x128xf32>
    %77 = vector.broadcast %76 : vector<1x128xf32> to vector<64x128xf32>
    %78 = arith.addf %75, %77 : vector<64x128xf32>
    %cst_76 = arith.constant 0.000000e+00 : f32
    %79 = vector.broadcast %cst_76 : f32 to vector<64x128xf32>
    %80 = arith.maximumf %78, %79 : vector<64x128xf32>
    %c0_77 = arith.constant 0 : index
    %c0_78 = arith.constant 0 : index
    %81 = vector.load %arg4[%c0_77, %c0_78] : memref<128x128xf32, #tpu.memory_space<vmem>>, vector<128x128xf32>
    %cst_79 = arith.constant dense<0.000000e+00> : vector<64x128xf32>
    %82 = tpu.matmul %80, %81, %cst_79 {dimension_numbers = #tpu.dot_dimension_numbers<[1], [0], [0], [1], [0, 0, 1, 1], [], []>} : vector<64x128xf32>, vector<128x128xf32>, vector<64x128xf32> -> vector<64x128xf32>
    %c0_80 = arith.constant 0 : index
    %c0_81 = arith.constant 0 : index
    %83 = vector.load %arg9[%c0_80, %c0_81] : memref<1x128xf32, #tpu.memory_space<vmem>>, vector<1x128xf32>
    %84 = vector.broadcast %83 : vector<1x128xf32> to vector<64x128xf32>
    %85 = arith.mulf %82, %84 : vector<64x128xf32>
    %c0_82 = arith.constant 0 : index
    %c0_83 = arith.constant 0 : index
    %86 = vector.load %arg10[%c0_82, %c0_83] : memref<1x128xf32, #tpu.memory_space<vmem>>, vector<1x128xf32>
    %87 = vector.broadcast %86 : vector<1x128xf32> to vector<64x128xf32>
    %88 = arith.addf %85, %87 : vector<64x128xf32>
    %89 = arith.addf %10, %88 : vector<64x128xf32>
    %cst_84 = arith.constant 0.000000e+00 : f32
    %90 = vector.broadcast %cst_84 : f32 to vector<64x128xf32>
    %91 = arith.maximumf %89, %90 : vector<64x128xf32>
    %c0_85 = arith.constant 0 : index
    %c0_86 = arith.constant 0 : index
    %c0_87 = arith.constant 0 : index
    %92 = vector.load %arg11[%c0_85, %c0_86, %c0_87] : memref<1x64x128xf32, #tpu.memory_space<vmem>>, vector<1x64x128xf32>
    %93 = vector.shape_cast %92 : vector<1x64x128xf32> to vector<64x128xf32>
    %94 = vector.shape_cast %91 : vector<64x128xf32> to vector<1x64x128xf32>
    tpu.vector_store %arg11[%c0_85, %c0_86, %c0_87], %94 {strides = array<i32>} : memref<1x64x128xf32, #tpu.memory_space<vmem>>, vector<1x64x128xf32>,
    return
  }
  func.func @transform_0(%arg0: i32) -> (i32, i32, i32) {
    %c0_i32 = arith.constant 0 : i32
    %c0_i32_0 = arith.constant 0 : i32
    %c0_i32_1 = arith.constant 0 : i32
    return %arg0, %c0_i32, %c0_i32_0 : i32, i32, i32
  }
  func.func @transform_1(%arg0: i32) -> (i32, i32) {
    %c0_i32 = arith.constant 0 : i32
    %c0_i32_0 = arith.constant 0 : i32
    %c0_i32_1 = arith.constant 0 : i32
    return %c0_i32, %c0_i32_0 : i32, i32
  }
  func.func @transform_2(%arg0: i32) -> (i32, i32, i32) {
    %c0_i32 = arith.constant 0 : i32
    %c0_i32_0 = arith.constant 0 : i32
    %c0_i32_1 = arith.constant 0 : i32
    %c0_i32_2 = arith.constant 0 : i32
    return %c0_i32, %c0_i32_0, %c0_i32_1 : i32, i32, i32
  }
  func.func @transform_3(%arg0: i32) -> (i32, i32) {
    %c0_i32 = arith.constant 0 : i32
    %c0_i32_0 = arith.constant 0 : i32
    %c0_i32_1 = arith.constant 0 : i32
    return %c0_i32, %c0_i32_0 : i32, i32
  }
  func.func @transform_4(%arg0: i32) -> (i32, i32) {
    %c0_i32 = arith.constant 0 : i32
    %c0_i32_0 = arith.constant 0 : i32
    %c0_i32_1 = arith.constant 0 : i32
    return %c0_i32, %c0_i32_0 : i32, i32
  }
  func.func @transform_5(%arg0: i32) -> (i32, i32) {
    %c0_i32 = arith.constant 0 : i32
    %c0_i32_0 = arith.constant 0 : i32
    %c0_i32_1 = arith.constant 0 : i32
    return %c0_i32, %c0_i32_0 : i32, i32
  }
  func.func @transform_6(%arg0: i32) -> (i32, i32) {
    %c0_i32 = arith.constant 0 : i32
    %c0_i32_0 = arith.constant 0 : i32
    %c0_i32_1 = arith.constant 0 : i32
    return %c0_i32, %c0_i32_0 : i32, i32
  }
  func.func @transform_7(%arg0: i32) -> (i32, i32) {
    %c0_i32 = arith.constant 0 : i32
    %c0_i32_0 = arith.constant 0 : i32
    %c0_i32_1 = arith.constant 0 : i32
    return %c0_i32, %c0_i32_0 : i32, i32
  }
  func.func @transform_8(%arg0: i32) -> (i32, i32) {
    %c0_i32 = arith.constant 0 : i32
    %c0_i32_0 = arith.constant 0 : i32
    %c0_i32_1 = arith.constant 0 : i32
    return %c0_i32, %c0_i32_0 : i32, i32
  }
  func.func @transform_9(%arg0: i32) -> (i32, i32) {
    %c0_i32 = arith.constant 0 : i32
    %c0_i32_0 = arith.constant 0 : i32
    %c0_i32_1 = arith.constant 0 : i32
    return %c0_i32, %c0_i32_0 : i32, i32
  }
  func.func @transform_10(%arg0: i32) -> (i32, i32, i32) {
    %c0_i32 = arith.constant 0 : i32
    %c0_i32_0 = arith.constant 0 : i32
    %c0_i32_1 = arith.constant 0 : i32
    return %arg0, %c0_i32, %c0_i32_0 : i32, i32, i32
  }
}

</mosaic_0001>

<llo_original>
// kernel: res_bottleneck_block.1
$region0: #{res_bottleneck_block.1}
  #allocation0 [shape = 'u32[]', space=smem, size = 0x4, offset = 0x4, fixed_abs, tag = 'smem constant byte address 0x4 - core index']
  #allocation1 [shape = 'u32[72,128]{1,0:T(1,128)}', space=vmem, size = 0x9000, scoped, tag = 'internal scratch']
  #allocation2 [shape = 'f32[10,10,128]{2,1,0:T(8,128)}', space=vmem, size = 0x14000, scoped, tag = 'scratch operand']
  %s0 = inlined_call_operand.vmem [shape: f32[2,64,64], index: 0, kind: input, shape index: {}]
  %s1 = inlined_call_operand.vmem [shape: f32[64,256], index: 1, kind: input, shape index: {}]
  %s2 = inlined_call_operand.vmem [shape: f32[9,128,128], index: 2, kind: input, shape index: {}]
  %s3 = inlined_call_operand.vmem [shape: f32[128,128], index: 3, kind: input, shape index: {}]
  %s4 = inlined_call_operand.vmem [shape: f32[1,256], index: 4, kind: input, shape index: {}]
  %s5 = inlined_call_operand.vmem [shape: f32[1,256], index: 5, kind: input, shape index: {}]
  %s6 = inlined_call_operand.vmem [shape: f32[1,128], index: 6, kind: input, shape index: {}]
  %s7 = inlined_call_operand.vmem [shape: f32[1,128], index: 7, kind: input, shape index: {}]
  %s8 = inlined_call_operand.vmem [shape: f32[1,128], index: 8, kind: input, shape index: {}]
  %s9 = inlined_call_operand.vmem [shape: f32[1,128], index: 9, kind: input, shape index: {}]
  %s10 = inlined_call_operand.vmem [shape: f32[2,64,128], index: 10, kind: output, shape index: {}]
  %s11 = sld [smem:[#allocation0]]
  $region73: #{res_bottleneck_block.1} parent=0
    _
  %s13 = ssub.s32 1, %s11
  %s14 = scalar_select 0, %s13, %s11
  loop: start=0, step=1, limit=4
  $region2: #{res_bottleneck_block.1} parent=0 // loop_pre_header
    _
  $region3: #{res_bottleneck_block.1} parent=0 // loop_header
    %s16 = sphi 0, %s20
    %p17 = scmp.ge.s32.totalorder %s16, 4
    %s26 = sphi 0, %s28
    %s29 = sphi 0, %s26
    %s30 = sphi 0, %s29
    %s46 = sphi 0, %s30
    %s50 = sphi 0, %s50
    %s52 = sphi 0, %s50
    %s53 = sphi 0, %s52
    %s67 = sphi 0, %s53
    %s71 = sphi 0, %s71
    %s73 = sphi 0, %s71
    %s74 = sphi 0, %s73
    %s88 = sphi 0, %s74
    %s92 = sphi 0, %s92
    %s94 = sphi 0, %s92
    %s95 = sphi 0, %s94
    %s109 = sphi 0, %s95
    %s113 = sphi 0, %s113
    %s115 = sphi 0, %s113
    %s116 = sphi 0, %s115
    %s130 = sphi 0, %s116
    %s134 = sphi 0, %s134
    %s136 = sphi 0, %s134
    %s137 = sphi 0, %s136
    %s151 = sphi 0, %s137
    %s155 = sphi 0, %s155
    %s157 = sphi 0, %s155
    %s158 = sphi 0, %s157
    %s172 = sphi 0, %s158
    %s176 = sphi 0, %s176
    %s178 = sphi 0, %s176
    %s179 = sphi 0, %s178
    %s193 = sphi 0, %s179
    %s197 = sphi 0, %s197
    %s199 = sphi 0, %s197
    %s200 = sphi 0, %s199
    %s214 = sphi 0, %s200
    %s218 = sphi 0, %s218
    %s220 = sphi 0, %s218
    %s221 = sphi 0, %s220
    %s235 = sphi 0, %s221
    %s241 = sphi 0, %s243
    %s244 = sphi 0, %s241
    %s245 = sphi 0, %s244
    %s261 = sphi 0, %s245
  $region4: #{res_bottleneck_block.1} parent=0 // loop_header_branch
    %19 = sbr.rel (%p17) target = $region8
  $region5: #{res_bottleneck_block.1} parent=0 // loop_body
    %s21 = ssub.s32 %s16, 1
    %s22 = ssub.s32 %s16, 2
    %s23 = sadd.s32 %s16, 1
    %s24 = ssub.s32 %s16, %s23
    %p25 = scmp.eq.s32.totalorder %s24, 0
    %s27 = sadd.s32 %s26, 1
    %s28 = scalar_select %p25, %s26, %s27
    %p31 = pneg %p25
    %p32 = scmp.eq.s32.totalorder %s16, 1
    %p33 = por %p31, %p32
    %p34 = scmp.ne.s32.totalorder %s26, %s29
    %p35 = scmp.eq.s32.totalorder %s16, 0
    %p36 = por %p34, %p35
    %p37 = scmp.ne.s32.totalorder %s26, %s29
    %p38 = scmp.eq.s32.totalorder %s21, 1
    %p39 = por %p37, %p38
    %p40 = scmp.ne.s32.totalorder %s29, %s30
    %p41 = scmp.eq.s32.totalorder %s21, 0
    %p42 = por %p40, %p41
    %p43 = scmp.ne.s32.totalorder %s29, %s30
    %p44 = scmp.eq.s32.totalorder %s22, 1
    %p45 = por %p43, %p44
    %p47 = scmp.ne.s32.totalorder %s30, %s46
    %p48 = scmp.eq.s32.totalorder %s22, 0
    %p49 = por %p47, %p48
    %s51 = sadd.s32 %s50, 1
    %p54 = scmp.eq.s32.totalorder %s16, 1
    %p55 = scmp.ne.s32.totalorder %s50, %s52
    %p56 = scmp.eq.s32.totalorder %s16, 0
    %p57 = por %p55, %p56
    %p58 = scmp.ne.s32.totalorder %s50, %s52
    %p59 = scmp.eq.s32.totalorder %s21, 1
    %p60 = por %p58, %p59
    %p61 = scmp.ne.s32.totalorder %s52, %s53
    %p62 = scmp.eq.s32.totalorder %s21, 0
    %p63 = por %p61, %p62
    %p64 = scmp.ne.s32.totalorder %s52, %s53
    %p65 = scmp.eq.s32.totalorder %s22, 1
    %p66 = por %p64, %p65
    %p68 = scmp.ne.s32.totalorder %s53, %s67
    %p69 = scmp.eq.s32.totalorder %s22, 0
    %p70 = por %p68, %p69
    %s72 = sadd.s32 %s71, 1
    %p75 = scmp.eq.s32.totalorder %s16, 1
    %p76 = scmp.ne.s32.totalorder %s71, %s73
    %p77 = scmp.eq.s32.totalorder %s16, 0
    %p78 = por %p76, %p77
    %p79 = scmp.ne.s32.totalorder %s71, %s73
    %p80 = scmp.eq.s32.totalorder %s21, 1
    %p81 = por %p79, %p80
    %p82 = scmp.ne.s32.totalorder %s73, %s74
    %p83 = scmp.eq.s32.totalorder %s21, 0
    %p84 = por %p82, %p83
    %p85 = scmp.ne.s32.totalorder %s73, %s74
    %p86 = scmp.eq.s32.totalorder %s22, 1
    %p87 = por %p85, %p86
    %p89 = scmp.ne.s32.totalorder %s74, %s88
    %p90 = scmp.eq.s32.totalorder %s22, 0
    %p91 = por %p89, %p90
    %s93 = sadd.s32 %s92, 1
    %p96 = scmp.eq.s32.totalorder %s16, 1
    %p97 = scmp.ne.s32.totalorder %s92, %s94
    %p98 = scmp.eq.s32.totalorder %s16, 0
    %p99 = por %p97, %p98
    %p100 = scmp.ne.s32.totalorder %s92, %s94
    %p101 = scmp.eq.s32.totalorder %s21, 1
    %p102 = por %p100, %p101
    %p103 = scmp.ne.s32.totalorder %s94, %s95
    %p104 = scmp.eq.s32.totalorder %s21, 0
    %p105 = por %p103, %p104
    %p106 = scmp.ne.s32.totalorder %s94, %s95
    %p107 = scmp.eq.s32.totalorder %s22, 1
    %p108 = por %p106, %p107
    %p110 = scmp.ne.s32.totalorder %s95, %s109
    %p111 = scmp.eq.s32.totalorder %s22, 0
    %p112 = por %p110, %p111
    %s114 = sadd.s32 %s113, 1
    %p117 = scmp.eq.s32.totalorder %s16, 1
    %p118 = scmp.ne.s32.totalorder %s113, %s115
    %p119 = scmp.eq.s32.totalorder %s16, 0
    %p120 = por %p118, %p119
    %p121 = scmp.ne.s32.totalorder %s113, %s115
    %p122 = scmp.eq.s32.totalorder %s21, 1
    %p123 = por %p121, %p122
    %p124 = scmp.ne.s32.totalorder %s115, %s116
    %p125 = scmp.eq.s32.totalorder %s21, 0
    %p126 = por %p124, %p125
    %p127 = scmp.ne.s32.totalorder %s115, %s116
    %p128 = scmp.eq.s32.totalorder %s22, 1
    %p129 = por %p127, %p128
    %p131 = scmp.ne.s32.totalorder %s116, %s130
    %p132 = scmp.eq.s32.totalorder %s22, 0
    %p133 = por %p131, %p132
    %s135 = sadd.s32 %s134, 1
    %p138 = scmp.eq.s32.totalorder %s16, 1
    %p139 = scmp.ne.s32.totalorder %s134, %s136
    %p140 = scmp.eq.s32.totalorder %s16, 0
    %p141 = por %p139, %p140
    %p142 = scmp.ne.s32.totalorder %s134, %s136
    %p143 = scmp.eq.s32.totalorder %s21, 1
    %p144 = por %p142, %p143
    %p145 = scmp.ne.s32.totalorder %s136, %s137
    %p146 = scmp.eq.s32.totalorder %s21, 0
    %p147 = por %p145, %p146
    %p148 = scmp.ne.s32.totalorder %s136, %s137
    %p149 = scmp.eq.s32.totalorder %s22, 1
    %p150 = por %p148, %p149
    %p152 = scmp.ne.s32.totalorder %s137, %s151
    %p153 = scmp.eq.s32.totalorder %s22, 0
    %p154 = por %p152, %p153
    %s156 = sadd.s32 %s155, 1
    %p159 = scmp.eq.s32.totalorder %s16, 1
    %p160 = scmp.ne.s32.totalorder %s155, %s157
    %p161 = scmp.eq.s32.totalorder %s16, 0
    %p162 = por %p160, %p161
    %p163 = scmp.ne.s32.totalorder %s155, %s157
    %p164 = scmp.eq.s32.totalorder %s21, 1
    %p165 = por %p163, %p164
    %p166 = scmp.ne.s32.totalorder %s157, %s158
    %p167 = scmp.eq.s32.totalorder %s21, 0
    %p168 = por %p166, %p167
    %p169 = scmp.ne.s32.totalorder %s157, %s158
    %p170 = scmp.eq.s32.totalorder %s22, 1
    %p171 = por %p169, %p170
    %p173 = scmp.ne.s32.totalorder %s158, %s172
    %p174 = scmp.eq.s32.totalorder %s22, 0
    %p175 = por %p173, %p174
    %s177 = sadd.s32 %s176, 1
    %p180 = scmp.eq.s32.totalorder %s16, 1
    %p181 = scmp.ne.s32.totalorder %s176, %s178
    %p182 = scmp.eq.s32.totalorder %s16, 0
    %p183 = por %p181, %p182
    %p184 = scmp.ne.s32.totalorder %s176, %s178
    %p185 = scmp.eq.s32.totalorder %s21, 1
    %p186 = por %p184, %p185
    %p187 = scmp.ne.s32.totalorder %s178, %s179
    %p188 = scmp.eq.s32.totalorder %s21, 0
    %p189 = por %p187, %p188
    %p190 = scmp.ne.s32.totalorder %s178, %s179
    %p191 = scmp.eq.s32.totalorder %s22, 1
    %p192 = por %p190, %p191
    %p194 = scmp.ne.s32.totalorder %s179, %s193
    %p195 = scmp.eq.s32.totalorder %s22, 0
    %p196 = por %p194, %p195
    %s198 = sadd.s32 %s197, 1
    %p201 = scmp.eq.s32.totalorder %s16, 1
    %p202 = scmp.ne.s32.totalorder %s197, %s199
    %p203 = scmp.eq.s32.totalorder %s16, 0
    %p204 = por %p202, %p203
    %p205 = scmp.ne.s32.totalorder %s197, %s199
    %p206 = scmp.eq.s32.totalorder %s21, 1
    %p207 = por %p205, %p206
    %p208 = scmp.ne.s32.totalorder %s199, %s200
    %p209 = scmp.eq.s32.totalorder %s21, 0
    %p210 = por %p208, %p209
    %p211 = scmp.ne.s32.totalorder %s199, %s200
    %p212 = scmp.eq.s32.totalorder %s22, 1
    %p213 = por %p211, %p212
    %p215 = scmp.ne.s32.totalorder %s200, %s214
    %p216 = scmp.eq.s32.totalorder %s22, 0
    %p217 = por %p215, %p216
    %s219 = sadd.s32 %s218, 1
    %p222 = scmp.eq.s32.totalorder %s16, 1
    %p223 = scmp.ne.s32.totalorder %s218, %s220
    %p224 = scmp.eq.s32.totalorder %s16, 0
    %p225 = por %p223, %p224
    %p226 = scmp.ne.s32.totalorder %s218, %s220
    %p227 = scmp.eq.s32.totalorder %s21, 1
    %p228 = por %p226, %p227
    %p229 = scmp.ne.s32.totalorder %s220, %s221
    %p230 = scmp.eq.s32.totalorder %s21, 0
    %p231 = por %p229, %p230
    %p232 = scmp.ne.s32.totalorder %s220, %s221
    %p233 = scmp.eq.s32.totalorder %s22, 1
    %p234 = por %p232, %p233
    %p236 = scmp.ne.s32.totalorder %s221, %s235
    %p237 = scmp.eq.s32.totalorder %s22, 0
    %p238 = por %p236, %p237
    %s239 = ssub.s32 %s16, %s23
    %p240 = scmp.eq.s32.totalorder %s239, 0
    %s242 = sadd.s32 %s241, 1
    %s243 = scalar_select %p240, %s241, %s242
    %p246 = pneg %p240
    %p247 = scmp.eq.s32.totalorder %s16, 1
    %p248 = por %p246, %p247
    %p249 = scmp.ne.s32.totalorder %s241, %s244
    %p250 = scmp.eq.s32.totalorder %s16, 0
    %p251 = por %p249, %p250
    %p252 = scmp.ne.s32.totalorder %s241, %s244
    %p253 = scmp.eq.s32.totalorder %s21, 1
    %p254 = por %p252, %p253
    %p255 = scmp.ne.s32.totalorder %s244, %s245
    %p256 = scmp.eq.s32.totalorder %s21, 0
    %p257 = por %p255, %p256
    %p258 = scmp.ne.s32.totalorder %s244, %s245
    %p259 = scmp.eq.s32.totalorder %s22, 1
    %p260 = por %p258, %p259
    %p262 = scmp.ne.s32.totalorder %s245, %s261
    %p263 = scmp.eq.s32.totalorder %s22, 0
    %p264 = por %p262, %p263
    %p265 = scmp.le.s32.totalorder 1, %s16
    %p266 = scmp.lt.s32.totalorder %s16, 3
    %p267 = pnand %p265, %p266
    %p268 = pneg %p267
    // Predicated region
    $region9: #{res_bottleneck_block.1} parent=5 // pred_check
      _
    $region10: #{res_bottleneck_block.1} parent=5 // pred_check_branch
      %270 = sbr.rel (%p267) target = $region12
    $region11: #{res_bottleneck_block.1} parent=5 // pred_region
      %s271 = ssub.s32 %s16, 1
      // Predicated region
      $region13: #{res_bottleneck_block.1} parent=11 // pred_check
        %p272 = pneg %p63
      $region14: #{res_bottleneck_block.1} parent=11 // pred_check_branch
        %274 = sbr.rel (%p272) target = $region16
      $region15: #{res_bottleneck_block.1} parent=11 // pred_region
        _
      $region16: #{res_bottleneck_block.1} parent=11 // pred_fallthru
        _
      // Predicated region
      $region17: #{res_bottleneck_block.1} parent=11 // pred_check
        %p275 = pneg %p84
      $region18: #{res_bottleneck_block.1} parent=11 // pred_check_branch
        %277 = sbr.rel (%p275) target = $region20
      $region19: #{res_bottleneck_block.1} parent=11 // pred_region
        _
      $region20: #{res_bottleneck_block.1} parent=11 // pred_fallthru
        _
      // Predicated region
      $region21: #{res_bottleneck_block.1} parent=11 // pred_check
        %p278 = pneg %p105
      $region22: #{res_bottleneck_block.1} parent=11 // pred_check_branch
        %280 = sbr.rel (%p278) target = $region24
      $region23: #{res_bottleneck_block.1} parent=11 // pred_region
        _
      $region24: #{res_bottleneck_block.1} parent=11 // pred_fallthru
        _
      // Predicated region
      $region25: #{res_bottleneck_block.1} parent=11 // pred_check
        %p281 = pneg %p126
      $region26: #{res_bottleneck_block.1} parent=11 // pred_check_branch
        %283 = sbr.rel (%p281) target = $region28
      $region27: #{res_bottleneck_block.1} parent=11 // pred_region
        _
      $region28: #{res_bottleneck_block.1} parent=11 // pred_fallthru
        _
      // Predicated region
      $region29: #{res_bottleneck_block.1} parent=11 // pred_check
        %p284 = pneg %p147
      $region30: #{res_bottleneck_block.1} parent=11 // pred_check_branch
        %286 = sbr.rel (%p284) target = $region32
      $region31: #{res_bottleneck_block.1} parent=11 // pred_region
        _
      $region32: #{res_bottleneck_block.1} parent=11 // pred_fallthru
        _
      // Predicated region
      $region33: #{res_bottleneck_block.1} parent=11 // pred_check
        %p287 = pneg %p168
      $region34: #{res_bottleneck_block.1} parent=11 // pred_check_branch
        %289 = sbr.rel (%p287) target = $region36
      $region35: #{res_bottleneck_block.1} parent=11 // pred_region
        _
      $region36: #{res_bottleneck_block.1} parent=11 // pred_fallthru
        _
      // Predicated region
      $region37: #{res_bottleneck_block.1} parent=11 // pred_check
        %p290 = pneg %p189
      $region38: #{res_bottleneck_block.1} parent=11 // pred_check_branch
        %292 = sbr.rel (%p290) target = $region40
      $region39: #{res_bottleneck_block.1} parent=11 // pred_region
        _
      $region40: #{res_bottleneck_block.1} parent=11 // pred_fallthru
        _
      // Predicated region
      $region41: #{res_bottleneck_block.1} parent=11 // pred_check
        %p293 = pneg %p210
      $region42: #{res_bottleneck_block.1} parent=11 // pred_check_branch
        %295 = sbr.rel (%p293) target = $region44
      $region43: #{res_bottleneck_block.1} parent=11 // pred_region
        _
      $region44: #{res_bottleneck_block.1} parent=11 // pred_fallthru
        _
      // Predicated region
      $region45: #{res_bottleneck_block.1} parent=11 // pred_check
        %p296 = pneg %p231
      $region46: #{res_bottleneck_block.1} parent=11 // pred_check_branch
        %298 = sbr.rel (%p296) target = $region48
      $region47: #{res_bottleneck_block.1} parent=11 // pred_region
        _
      $region48: #{res_bottleneck_block.1} parent=11 // pred_fallthru
        _
    $region12: #{res_bottleneck_block.1} parent=5 // pred_fallthru
      _
    %p299 = scmp.lt.s32.totalorder %s16, 2
    // Predicated region
    $region49: #{res_bottleneck_block.1} parent=5 // pred_check
      %p300 = pneg %p299
    $region50: #{res_bottleneck_block.1} parent=5 // pred_check_branch
      %302 = sbr.rel (%p300) target = $region52
    $region51: #{res_bottleneck_block.1} parent=5 // pred_region
      // Predicated region
      $region53: #{res_bottleneck_block.1} parent=51 // pred_check
        %p303 = pneg %p36
      $region54: #{res_bottleneck_block.1} parent=51 // pred_check_branch
        %305 = sbr.rel (%p303) target = $region56
      $region55: #{res_bottleneck_block.1} parent=51 // pred_region
        %p306 = scmp.lt.s32.totalorder %s16, 1
        %s307 = scalar_select %p306, %s16, 1
        %s308 = smul.addr %s307, 8
        %s309 = smul.addr %s308, 8
        %s310 = scalar_lea.vmem %s0, %s309
      $region56: #{res_bottleneck_block.1} parent=51 // pred_fallthru
        _
    $region52: #{res_bottleneck_block.1} parent=5 // pred_fallthru
      _
    %p311 = scmp.le.s32.totalorder 1, %s16
    %p312 = scmp.lt.s32.totalorder %s16, 3
    %p313 = pnand %p311, %p312
    %p314 = pneg %p313
    // Predicated region
    $region57: #{res_bottleneck_block.1} parent=5 // pred_check
      _
    $region58: #{res_bottleneck_block.1} parent=5 // pred_check_branch
      %316 = sbr.rel (%p313) target = $region60
    $region59: #{res_bottleneck_block.1} parent=5 // pred_region
      %s317 = ssub.s32 %s16, 1
      %p318 = scmp.lt.s32.totalorder %s21, 1
      %s319 = scalar_select %p318, %s21, 1
      %s320 = smul.addr %s319, 8
      %s321 = smul.addr %s320, 8
      %s322 = scalar_lea.vmem %s0, %s321
      %p323 = pneg %p42
      %p324 = pneg %p39
      %p325 = pneg %p63
      %p326 = pneg %p60
      %p327 = pneg %p84
      %p328 = pneg %p81
      %p329 = pneg %p105
      %p330 = pneg %p102
      %p331 = pneg %p126
      %p332 = pneg %p123
      %p333 = pneg %p147
      %p334 = pneg %p144
      %p335 = pneg %p168
      %p336 = pneg %p165
      %p337 = pneg %p189
      %p338 = pneg %p186
      %p339 = pneg %p210
      %p340 = pneg %p207
      %p341 = pneg %p231
      %p342 = pneg %p228
      %p343 = pneg %p257
      %p344 = pneg %p254
      %p345 = scmp.lt.s32.totalorder %s21, 1
      %s346 = scalar_select %p345, %s21, 1
      %s347 = smul.addr %s346, 8
      %s348 = smul.addr %s347, 8
      %s349 = scalar_lea.vmem %s10, %s348
      %p350 = scmp.lt.s32.totalorder %s21, 1
      %s351 = scalar_select %p350, %s21, 1
      %s352 = smul.addr %s351, 8
      %s353 = smul.addr %s352, 8
      %s354 = scalar_lea.vmem %s0, %s353
      %p355 = scmp.lt.s32.totalorder %s21, 1
      %s356 = scalar_select %p355, %s21, 1
      %s357 = smul.addr %s356, 8
      %s358 = smul.addr %s357, 8
      %s359 = scalar_lea.vmem %s10, %s358
      %v360 = vld [vmem:[%s354] sm:$0xff]
      %v361 = vld [vmem:[%s354 + $0x8] sm:$0xff]
      %v362 = vld [vmem:[%s354 + $0x10] sm:$0xff]
      %v363 = vld [vmem:[%s354 + $0x18] sm:$0xff]
      %v364 = vld [vmem:[%s354 + $0x20] sm:$0xff]
      %v365 = vld [vmem:[%s354 + $0x28] sm:$0xff]
      %v366 = vld [vmem:[%s354 + $0x30] sm:$0xff]
      %v367 = vld [vmem:[%s354 + $0x38] sm:$0xff]
      %v368 = vld [vmem:[%s1] sm:$0xff]
      %v369 = vld [vmem:[%s1 + $0x8] sm:$0xff]
      %v370 = vld [vmem:[%s1 + $0x10] sm:$0xff]
      %v371 = vld [vmem:[%s1 + $0x18] sm:$0xff]
      %v372 = vld [vmem:[%s1 + $0x20] sm:$0xff]
      %v373 = vld [vmem:[%s1 + $0x28] sm:$0xff]
      %v374 = vld [vmem:[%s1 + $0x30] sm:$0xff]
      %v375 = vld [vmem:[%s1 + $0x38] sm:$0xff]
      %v376 = vld [vmem:[%s1 + $0x40] sm:$0xff]
      %v377 = vld [vmem:[%s1 + $0x48] sm:$0xff]
      %v378 = vld [vmem:[%s1 + $0x50] sm:$0xff]
      %v379 = vld [vmem:[%s1 + $0x58] sm:$0xff]
      %v380 = vld [vmem:[%s1 + $0x60] sm:$0xff]
      %v381 = vld [vmem:[%s1 + $0x68] sm:$0xff]
      %v382 = vld [vmem:[%s1 + $0x70] sm:$0xff]
      %v383 = vld [vmem:[%s1 + $0x78] sm:$0xff]
      %vm384 = vcmask 523264
      %v386 = vsel %vm384, %v360, 0
      %v389 = vsel %vm384, %v361, 0
      %v392 = vsel %vm384, %v362, 0
      %v395 = vsel %vm384, %v363, 0
      %v398 = vsel %vm384, %v364, 0
      %v401 = vsel %vm384, %v365, 0
      %v404 = vsel %vm384, %v366, 0
      %v407 = vsel %vm384, %v367, 0
      %409 = vmatpush.msra.mxu0 0.0
      %410 = vmatpush.msra.mxu0 0.0
      %411 = vmatpush.msra.mxu0 0.0
      %412 = vmatpush.msra.mxu0 0.0
      %413 = vmatpush.msra.mxu0 0.0
      %414 = vmatpush.msra.mxu0 0.0
      %415 = vmatpush.msra.mxu0 0.0
      %416 = vmatpush.msra.mxu0 0.0
      %417 = vmatpush.msra.mxu0 %v382
      %418 = vmatpush.msra.mxu0 %v380
      %419 = vmatpush.msra.mxu0 %v378
      %420 = vmatpush.msra.mxu0 %v376
      %421 = vmatpush.msra.mxu0 %v374
      %422 = vmatpush.msra.mxu0 %v372
      %423 = vmatpush.msra.mxu0 %v370
      %424 = vmatpush.msra.mxu0 %v368
      %425 = vmatmul.f32.gmra.mxu0 %v386
      %v426 = vpop.f32.mrf.mxu0
      %v427 = vadd.f32 0.0, %v426
      %428 = vmatmul.f32.gmra.mxu0 %v389
      %v429 = vpop.f32.mrf.mxu0
      %v430 = vadd.f32 0.0, %v429
      %431 = vmatmul.f32.gmra.mxu0 %v392
      %v432 = vpop.f32.mrf.mxu0
      %v433 = vadd.f32 0.0, %v432
      %434 = vmatmul.f32.gmra.mxu0 %v395
      %v435 = vpop.f32.mrf.mxu0
      %v436 = vadd.f32 0.0, %v435
      %437 = vmatmul.f32.gmra.mxu0 %v398
      %v438 = vpop.f32.mrf.mxu0
      %v439 = vadd.f32 0.0, %v438
      %440 = vmatmul.f32.gmra.mxu0 %v401
      %v441 = vpop.f32.mrf.mxu0
      %v442 = vadd.f32 0.0, %v441
      %443 = vmatmul.f32.gmra.mxu0 %v404
      %v444 = vpop.f32.mrf.mxu0
      %v445 = vadd.f32 0.0, %v444
      %446 = vmatmul.f32.gmra.mxu0 %v407
      %v447 = vpop.f32.mrf.mxu0
      %v448 = vadd.f32 0.0, %v447
      %449 = vdwg.mxu0
      %450 = vmatpush.msra.mxu0 0.0
      %451 = vmatpush.msra.mxu0 0.0
      %452 = vmatpush.msra.mxu0 0.0
      %453 = vmatpush.msra.mxu0 0.0
      %454 = vmatpush.msra.mxu0 0.0
      %455 = vmatpush.msra.mxu0 0.0
      %456 = vmatpush.msra.mxu0 0.0
      %457 = vmatpush.msra.mxu0 0.0
      %458 = vmatpush.msra.mxu0 %v383
      %459 = vmatpush.msra.mxu0 %v381
      %460 = vmatpush.msra.mxu0 %v379
      %461 = vmatpush.msra.mxu0 %v377
      %462 = vmatpush.msra.mxu0 %v375
      %463 = vmatpush.msra.mxu0 %v373
      %464 = vmatpush.msra.mxu0 %v371
      %465 = vmatpush.msra.mxu0 %v369
      %466 = vmatmul.f32.gmra.mxu0 %v386
      %v467 = vpop.f32.mrf.mxu0
      %v468 = vadd.f32 0.0, %v467
      %469 = vmatmul.f32.gmra.mxu0 %v389
      %v470 = vpop.f32.mrf.mxu0
      %v471 = vadd.f32 0.0, %v470
      %472 = vmatmul.f32.gmra.mxu0 %v392
      %v473 = vpop.f32.mrf.mxu0
      %v474 = vadd.f32 0.0, %v473
      %475 = vmatmul.f32.gmra.mxu0 %v395
      %v476 = vpop.f32.mrf.mxu0
      %v477 = vadd.f32 0.0, %v476
      %478 = vmatmul.f32.gmra.mxu0 %v398
      %v479 = vpop.f32.mrf.mxu0
      %v480 = vadd.f32 0.0, %v479
      %481 = vmatmul.f32.gmra.mxu0 %v401
      %v482 = vpop.f32.mrf.mxu0
      %v483 = vadd.f32 0.0, %v482
      %484 = vmatmul.f32.gmra.mxu0 %v404
      %v485 = vpop.f32.mrf.mxu0
      %v486 = vadd.f32 0.0, %v485
      %487 = vmatmul.f32.gmra.mxu0 %v407
      %v488 = vpop.f32.mrf.mxu0
      %v489 = vadd.f32 0.0, %v488
      %490 = vdwg.mxu0
      %v491 = vld [vmem:[%s4] sm:$0x3]
      %v493 = vperm.slane %v491, 0
      %v494 = vperm.slane %v491, 1
      %v497 = vmul.f32 %v427, %v493
      %v498 = vmul.f32 %v468, %v494
      %v499 = vmul.f32 %v430, %v493
      %v500 = vmul.f32 %v471, %v494
      %v501 = vmul.f32 %v433, %v493
      %v502 = vmul.f32 %v474, %v494
      %v503 = vmul.f32 %v436, %v493
      %v504 = vmul.f32 %v477, %v494
      %v505 = vmul.f32 %v439, %v493
      %v506 = vmul.f32 %v480, %v494
      %v507 = vmul.f32 %v442, %v493
      %v508 = vmul.f32 %v483, %v494
      %v509 = vmul.f32 %v445, %v493
      %v510 = vmul.f32 %v486, %v494
      %v511 = vmul.f32 %v448, %v493
      %v512 = vmul.f32 %v489, %v494
      %v513 = vld [vmem:[%s5] sm:$0x3]
      %v515 = vperm.slane %v513, 0
      %v516 = vperm.slane %v513, 1
      %v519 = vadd.f32 %v497, %v515
      %v520 = vadd.f32 %v498, %v516
      %v521 = vadd.f32 %v499, %v515
      %v522 = vadd.f32 %v500, %v516
      %v523 = vadd.f32 %v501, %v515
      %v524 = vadd.f32 %v502, %v516
      %v525 = vadd.f32 %v503, %v515
      %v526 = vadd.f32 %v504, %v516
      %v527 = vadd.f32 %v505, %v515
      %v528 = vadd.f32 %v506, %v516
      %v529 = vadd.f32 %v507, %v515
      %v530 = vadd.f32 %v508, %v516
      %v531 = vadd.f32 %v509, %v515
      %v532 = vadd.f32 %v510, %v516
      %v533 = vadd.f32 %v511, %v515
      %v534 = vadd.f32 %v512, %v516
      %v535 = vmax.f32 %v520, 0.0
      %v536 = vmax.f32 %v522, 0.0
      %v537 = vmax.f32 %v524, 0.0
      %v538 = vmax.f32 %v526, 0.0
      %v539 = vmax.f32 %v528, 0.0
      %v540 = vmax.f32 %v530, 0.0
      %v541 = vmax.f32 %v532, 0.0
      %v542 = vmax.f32 %v534, 0.0
      %543 = vst [vmem:[#allocation2] sm:$0xff] 0.0
      %544 = vst [vmem:[#allocation2 + $0x8] sm:$0x3] 0.0
      %545 = vst [vmem:[#allocation2 + $0x10] sm:$0xff] 0.0
      %546 = vst [vmem:[#allocation2 + $0x18] sm:$0x3] 0.0
      %547 = vst [vmem:[#allocation2 + $0x20] sm:$0xff] 0.0
      %548 = vst [vmem:[#allocation2 + $0x28] sm:$0x3] 0.0
      %549 = vst [vmem:[#allocation2 + $0x30] sm:$0xff] 0.0
      %550 = vst [vmem:[#allocation2 + $0x38] sm:$0x3] 0.0
      %551 = vst [vmem:[#allocation2 + $0x40] sm:$0xff] 0.0
      %552 = vst [vmem:[#allocation2 + $0x48] sm:$0x3] 0.0
      %553 = vst [vmem:[#allocation2 + $0x50] sm:$0xff] 0.0
      %554 = vst [vmem:[#allocation2 + $0x58] sm:$0x3] 0.0
      %555 = vst [vmem:[#allocation2 + $0x60] sm:$0xff] 0.0
      %556 = vst [vmem:[#allocation2 + $0x68] sm:$0x3] 0.0
      %557 = vst [vmem:[#allocation2 + $0x70] sm:$0xff] 0.0
      %558 = vst [vmem:[#allocation2 + $0x78] sm:$0x3] 0.0
      %559 = vst [vmem:[#allocation2 + $0x80] sm:$0xff] 0.0
      %560 = vst [vmem:[#allocation2 + $0x88] sm:$0x3] 0.0
      %561 = vst [vmem:[#allocation2 + $0x90] sm:$0xff] 0.0
      %562 = vst [vmem:[#allocation2 + $0x98] sm:$0x3] 0.0
      %s563 = scalar_lea.vmem [#allocation2], 16
      %564 = vst [vmem:[%s563 + $0x1] sm:$0xff] %v535
      %565 = vst [vmem:[%s563 + $0x11] sm:$0xff] %v536
      %566 = vst [vmem:[%s563 + $0x21] sm:$0xff] %v537
      %567 = vst [vmem:[%s563 + $0x31] sm:$0xff] %v538
      %568 = vst [vmem:[%s563 + $0x41] sm:$0xff] %v539
      %569 = vst [vmem:[%s563 + $0x51] sm:$0xff] %v540
      %570 = vst [vmem:[%s563 + $0x61] sm:$0xff] %v541
      %571 = vst [vmem:[%s563 + $0x71] sm:$0xff] %v542
      %v572 = vld [vmem:[#allocation2] sm:$0xff]
      %v573 = vld [vmem:[#allocation2 + $0x10] sm:$0xff]
      %v574 = vld [vmem:[#allocation2 + $0x20] sm:$0xff]
      %v575 = vld [vmem:[#allocation2 + $0x30] sm:$0xff]
      %v576 = vld [vmem:[#allocation2 + $0x40] sm:$0xff]
      %v577 = vld [vmem:[#allocation2 + $0x50] sm:$0xff]
      %v578 = vld [vmem:[#allocation2 + $0x60] sm:$0xff]
      %v579 = vld [vmem:[#allocation2 + $0x70] sm:$0xff]
      %v580 = vld [vmem:[%s2] sm:$0xff]
      %v581 = vld [vmem:[%s2 + $0x8] sm:$0xff]
      %v582 = vld [vmem:[%s2 + $0x10] sm:$0xff]
      %v583 = vld [vmem:[%s2 + $0x18] sm:$0xff]
      %v584 = vld [vmem:[%s2 + $0x20] sm:$0xff]
      %v585 = vld [vmem:[%s2 + $0x28] sm:$0xff]
      %v586 = vld [vmem:[%s2 + $0x30] sm:$0xff]
      %v587 = vld [vmem:[%s2 + $0x38] sm:$0xff]
      %v588 = vld [vmem:[%s2 + $0x40] sm:$0xff]
      %v589 = vld [vmem:[%s2 + $0x48] sm:$0xff]
      %v590 = vld [vmem:[%s2 + $0x50] sm:$0xff]
      %v591 = vld [vmem:[%s2 + $0x58] sm:$0xff]
      %v592 = vld [vmem:[%s2 + $0x60] sm:$0xff]
      %v593 = vld [vmem:[%s2 + $0x68] sm:$0xff]
      %v594 = vld [vmem:[%s2 + $0x70] sm:$0xff]
      %v595 = vld [vmem:[%s2 + $0x78] sm:$0xff]
      %v596 = vld [vmem:[#allocation2 + $0x1] sm:$0xff]
      %v597 = vld [vmem:[#allocation2 + $0x11] sm:$0xff]
      %v598 = vld [vmem:[#allocation2 + $0x21] sm:$0xff]
      %v599 = vld [vmem:[#allocation2 + $0x31] sm:$0xff]
      %v600 = vld [vmem:[#allocation2 + $0x41] sm:$0xff]
      %v601 = vld [vmem:[#allocation2 + $0x51] sm:$0xff]
      %v602 = vld [vmem:[#allocation2 + $0x61] sm:$0xff]
      %v603 = vld [vmem:[#allocation2 + $0x71] sm:$0xff]
      %s604 = scalar_lea.vmem %s2, 128
      %v605 = vld [vmem:[%s604] sm:$0xff]
      %v606 = vld [vmem:[%s604 + $0x8] sm:$0xff]
      %v607 = vld [vmem:[%s604 + $0x10] sm:$0xff]
      %v608 = vld [vmem:[%s604 + $0x18] sm:$0xff]
      %v609 = vld [vmem:[%s604 + $0x20] sm:$0xff]
      %v610 = vld [vmem:[%s604 + $0x28] sm:$0xff]
      %v611 = vld [vmem:[%s604 + $0x30] sm:$0xff]
      %v612 = vld [vmem:[%s604 + $0x38] sm:$0xff]
      %v613 = vld [vmem:[%s604 + $0x40] sm:$0xff]
      %v614 = vld [vmem:[%s604 + $0x48] sm:$0xff]
      %v615 = vld [vmem:[%s604 + $0x50] sm:$0xff]
      %v616 = vld [vmem:[%s604 + $0x58] sm:$0xff]
      %v617 = vld [vmem:[%s604 + $0x60] sm:$0xff]
      %v618 = vld [vmem:[%s604 + $0x68] sm:$0xff]
      %v619 = vld [vmem:[%s604 + $0x70] sm:$0xff]
      %v620 = vld [vmem:[%s604 + $0x78] sm:$0xff]
      %621 = vmatpush.msra.mxu0 %v620
      %622 = vmatpush.msra.mxu0 %v619
      %623 = vmatpush.msra.mxu0 %v618
      %624 = vmatpush.msra.mxu0 %v617
      %625 = vmatpush.msra.mxu0 %v616
      %626 = vmatpush.msra.mxu0 %v615
      %627 = vmatpush.msra.mxu0 %v614
      %628 = vmatpush.msra.mxu0 %v613
      %629 = vmatpush.msra.mxu0 %v612
      %630 = vmatpush.msra.mxu0 %v611
      %631 = vmatpush.msra.mxu0 %v610
      %632 = vmatpush.msra.mxu0 %v609
      %633 = vmatpush.msra.mxu0 %v608
      %634 = vmatpush.msra.mxu0 %v607
      %635 = vmatpush.msra.mxu0 %v606
      %636 = vmatpush.msra.mxu0 %v605
      %637 = vmatmul.f32.gmra.mxu0 %v596
      %v638 = vpop.f32.mrf.mxu0
      %v639 = vadd.f32 0.0, %v638
      %640 = vmatmul.f32.gmra.mxu0 %v597
      %v641 = vpop.f32.mrf.mxu0
      %v642 = vadd.f32 0.0, %v641
      %643 = vmatmul.f32.gmra.mxu0 %v598
      %v644 = vpop.f32.mrf.mxu0
      %v645 = vadd.f32 0.0, %v644
      %646 = vmatmul.f32.gmra.mxu0 %v599
      %v647 = vpop.f32.mrf.mxu0
      %v648 = vadd.f32 0.0, %v647
      %649 = vmatmul.f32.gmra.mxu0 %v600
      %v650 = vpop.f32.mrf.mxu0
      %v651 = vadd.f32 0.0, %v650
      %652 = vmatmul.f32.gmra.mxu0 %v601
      %v653 = vpop.f32.mrf.mxu0
      %v654 = vadd.f32 0.0, %v653
      %655 = vmatmul.f32.gmra.mxu0 %v602
      %v656 = vpop.f32.mrf.mxu0
      %v657 = vadd.f32 0.0, %v656
      %658 = vmatmul.f32.gmra.mxu0 %v603
      %v659 = vpop.f32.mrf.mxu0
      %v660 = vadd.f32 0.0, %v659
      %661 = vdwg.mxu0
      %662 = vmatpush.msra.mxu0 %v595
      %663 = vmatpush.msra.mxu0 %v594
      %664 = vmatpush.msra.mxu0 %v593
      %665 = vmatpush.msra.mxu0 %v592
      %666 = vmatpush.msra.mxu0 %v591
      %667 = vmatpush.msra.mxu0 %v590
      %668 = vmatpush.msra.mxu0 %v589
      %669 = vmatpush.msra.mxu0 %v588
      %670 = vmatpush.msra.mxu0 %v587
      %671 = vmatpush.msra.mxu0 %v586
      %672 = vmatpush.msra.mxu0 %v585
      %673 = vmatpush.msra.mxu0 %v584
      %674 = vmatpush.msra.mxu0 %v583
      %675 = vmatpush.msra.mxu0 %v582
      %676 = vmatpush.msra.mxu0 %v581
      %677 = vmatpush.msra.mxu0 %v580
      %678 = vmatmul.f32.gmra.mxu0 %v572
      %v679 = vpop.f32.mrf.mxu0
      %v680 = vadd.f32 %v639, %v679
      %681 = vmatmul.f32.gmra.mxu0 %v573
      %v682 = vpop.f32.mrf.mxu0
      %v683 = vadd.f32 %v642, %v682
      %684 = vmatmul.f32.gmra.mxu0 %v574
      %v685 = vpop.f32.mrf.mxu0
      %v686 = vadd.f32 %v645, %v685
      %687 = vmatmul.f32.gmra.mxu0 %v575
      %v688 = vpop.f32.mrf.mxu0
      %v689 = vadd.f32 %v648, %v688
      %690 = vmatmul.f32.gmra.mxu0 %v576
      %v691 = vpop.f32.mrf.mxu0
      %v692 = vadd.f32 %v651, %v691
      %693 = vmatmul.f32.gmra.mxu0 %v577
      %v694 = vpop.f32.mrf.mxu0
      %v695 = vadd.f32 %v654, %v694
      %696 = vmatmul.f32.gmra.mxu0 %v578
      %v697 = vpop.f32.mrf.mxu0
      %v698 = vadd.f32 %v657, %v697
      %699 = vmatmul.f32.gmra.mxu0 %v579
      %v700 = vpop.f32.mrf.mxu0
      %v701 = vadd.f32 %v660, %v700
      %702 = vdwg.mxu0
      %v703 = vld [vmem:[#allocation2 + $0x2] sm:$0xff]
      %v704 = vld [vmem:[#allocation2 + $0x12] sm:$0xff]
      %v705 = vld [vmem:[#allocation2 + $0x22] sm:$0xff]
      %v706 = vld [vmem:[#allocation2 + $0x32] sm:$0xff]
      %v707 = vld [vmem:[#allocation2 + $0x42] sm:$0xff]
      %v708 = vld [vmem:[#allocation2 + $0x52] sm:$0xff]
      %v709 = vld [vmem:[#allocation2 + $0x62] sm:$0xff]
      %v710 = vld [vmem:[#allocation2 + $0x72] sm:$0xff]
      %s711 = scalar_lea.vmem %s2, 256
      %v712 = vld [vmem:[%s711] sm:$0xff]
      %v713 = vld [vmem:[%s711 + $0x8] sm:$0xff]
      %v714 = vld [vmem:[%s711 + $0x10] sm:$0xff]
      %v715 = vld [vmem:[%s711 + $0x18] sm:$0xff]
      %v716 = vld [vmem:[%s711 + $0x20] sm:$0xff]
      %v717 = vld [vmem:[%s711 + $0x28] sm:$0xff]
      %v718 = vld [vmem:[%s711 + $0x30] sm:$0xff]
      %v719 = vld [vmem:[%s711 + $0x38] sm:$0xff]
      %v720 = vld [vmem:[%s711 + $0x40] sm:$0xff]
      %v721 = vld [vmem:[%s711 + $0x48] sm:$0xff]
      %v722 = vld [vmem:[%s711 + $0x50] sm:$0xff]
      %v723 = vld [vmem:[%s711 + $0x58] sm:$0xff]
      %v724 = vld [vmem:[%s711 + $0x60] sm:$0xff]
      %v725 = vld [vmem:[%s711 + $0x68] sm:$0xff]
      %v726 = vld [vmem:[%s711 + $0x70] sm:$0xff]
      %v727 = vld [vmem:[%s711 + $0x78] sm:$0xff]
      %728 = vmatpush.msra.mxu0 %v727
      %729 = vmatpush.msra.mxu0 %v726
      %730 = vmatpush.msra.mxu0 %v725
      %731 = vmatpush.msra.mxu0 %v724
      %732 = vmatpush.msra.mxu0 %v723
      %733 = vmatpush.msra.mxu0 %v722
      %734 = vmatpush.msra.mxu0 %v721
      %735 = vmatpush.msra.mxu0 %v720
      %736 = vmatpush.msra.mxu0 %v719
      %737 = vmatpush.msra.mxu0 %v718
      %738 = vmatpush.msra.mxu0 %v717
      %739 = vmatpush.msra.mxu0 %v716
      %740 = vmatpush.msra.mxu0 %v715
      %741 = vmatpush.msra.mxu0 %v714
      %742 = vmatpush.msra.mxu0 %v713
      %743 = vmatpush.msra.mxu0 %v712
      %744 = vmatmul.f32.gmra.mxu0 %v703
      %v745 = vpop.f32.mrf.mxu0
      %v746 = vadd.f32 0.0, %v745
      %747 = vmatmul.f32.gmra.mxu0 %v704
      %v748 = vpop.f32.mrf.mxu0
      %v749 = vadd.f32 0.0, %v748
      %750 = vmatmul.f32.gmra.mxu0 %v705
      %v751 = vpop.f32.mrf.mxu0
      %v752 = vadd.f32 0.0, %v751
      %753 = vmatmul.f32.gmra.mxu0 %v706
      %v754 = vpop.f32.mrf.mxu0
      %v755 = vadd.f32 0.0, %v754
      %756 = vmatmul.f32.gmra.mxu0 %v707
      %v757 = vpop.f32.mrf.mxu0
      %v758 = vadd.f32 0.0, %v757
      %759 = vmatmul.f32.gmra.mxu0 %v708
      %v760 = vpop.f32.mrf.mxu0
      %v761 = vadd.f32 0.0, %v760
      %762 = vmatmul.f32.gmra.mxu0 %v709
      %v763 = vpop.f32.mrf.mxu0
      %v764 = vadd.f32 0.0, %v763
      %765 = vmatmul.f32.gmra.mxu0 %v710
      %v766 = vpop.f32.mrf.mxu0
      %v767 = vadd.f32 0.0, %v766
      %768 = vdwg.mxu0
      %v769 = vadd.f32 %v680, %v746
      %v770 = vadd.f32 %v683, %v749
      %v771 = vadd.f32 %v686, %v752
      %v772 = vadd.f32 %v689, %v755
      %v773 = vadd.f32 %v692, %v758
      %v774 = vadd.f32 %v695, %v761
      %v775 = vadd.f32 %v698, %v764
      %v776 = vadd.f32 %v701, %v767
      %v777 = vld [vmem:[%s563] sm:$0xff]
      %v778 = vld [vmem:[%s563 + $0x10] sm:$0xff]
      %v779 = vld [vmem:[%s563 + $0x20] sm:$0xff]
      %v780 = vld [vmem:[%s563 + $0x30] sm:$0xff]
      %v781 = vld [vmem:[%s563 + $0x40] sm:$0xff]
      %v782 = vld [vmem:[%s563 + $0x50] sm:$0xff]
      %v783 = vld [vmem:[%s563 + $0x60] sm:$0xff]
      %v784 = vld [vmem:[%s563 + $0x70] sm:$0xff]
      %s785 = scalar_lea.vmem %s2, 384
      %v786 = vld [vmem:[%s785] sm:$0xff]
      %v787 = vld [vmem:[%s785 + $0x8] sm:$0xff]
      %v788 = vld [vmem:[%s785 + $0x10] sm:$0xff]
      %v789 = vld [vmem:[%s785 + $0x18] sm:$0xff]
      %v790 = vld [vmem:[%s785 + $0x20] sm:$0xff]
      %v791 = vld [vmem:[%s785 + $0x28] sm:$0xff]
      %v792 = vld [vmem:[%s785 + $0x30] sm:$0xff]
      %v793 = vld [vmem:[%s785 + $0x38] sm:$0xff]
      %v794 = vld [vmem:[%s785 + $0x40] sm:$0xff]
      %v795 = vld [vmem:[%s785 + $0x48] sm:$0xff]
      %v796 = vld [vmem:[%s785 + $0x50] sm:$0xff]
      %v797 = vld [vmem:[%s785 + $0x58] sm:$0xff]
      %v798 = vld [vmem:[%s785 + $0x60] sm:$0xff]
      %v799 = vld [vmem:[%s785 + $0x68] sm:$0xff]
      %v800 = vld [vmem:[%s785 + $0x70] sm:$0xff]
      %v801 = vld [vmem:[%s785 + $0x78] sm:$0xff]
      %802 = vmatpush.msra.mxu0 %v801
      %803 = vmatpush.msra.mxu0 %v800
      %804 = vmatpush.msra.mxu0 %v799
      %805 = vmatpush.msra.mxu0 %v798
      %806 = vmatpush.msra.mxu0 %v797
      %807 = vmatpush.msra.mxu0 %v796
      %808 = vmatpush.msra.mxu0 %v795
      %809 = vmatpush.msra.mxu0 %v794
      %810 = vmatpush.msra.mxu0 %v793
      %811 = vmatpush.msra.mxu0 %v792
      %812 = vmatpush.msra.mxu0 %v791
      %813 = vmatpush.msra.mxu0 %v790
      %814 = vmatpush.msra.mxu0 %v789
      %815 = vmatpush.msra.mxu0 %v788
      %816 = vmatpush.msra.mxu0 %v787
      %817 = vmatpush.msra.mxu0 %v786
      %818 = vmatmul.f32.gmra.mxu0 %v777
      %v819 = vpop.f32.mrf.mxu0
      %v820 = vadd.f32 0.0, %v819
      %821 = vmatmul.f32.gmra.mxu0 %v778
      %v822 = vpop.f32.mrf.mxu0
      %v823 = vadd.f32 0.0, %v822
      %824 = vmatmul.f32.gmra.mxu0 %v779
      %v825 = vpop.f32.mrf.mxu0
      %v826 = vadd.f32 0.0, %v825
      %827 = vmatmul.f32.gmra.mxu0 %v780
      %v828 = vpop.f32.mrf.mxu0
      %v829 = vadd.f32 0.0, %v828
      %830 = vmatmul.f32.gmra.mxu0 %v781
      %v831 = vpop.f32.mrf.mxu0
      %v832 = vadd.f32 0.0, %v831
      %833 = vmatmul.f32.gmra.mxu0 %v782
      %v834 = vpop.f32.mrf.mxu0
      %v835 = vadd.f32 0.0, %v834
      %836 = vmatmul.f32.gmra.mxu0 %v783
      %v837 = vpop.f32.mrf.mxu0
      %v838 = vadd.f32 0.0, %v837
      %839 = vmatmul.f32.gmra.mxu0 %v784
      %v840 = vpop.f32.mrf.mxu0
      %v841 = vadd.f32 0.0, %v840
      %842 = vdwg.mxu0
      %v843 = vadd.f32 %v769, %v820
      %v844 = vadd.f32 %v770, %v823
      %v845 = vadd.f32 %v771, %v826
      %v846 = vadd.f32 %v772, %v829
      %v847 = vadd.f32 %v773, %v832
      %v848 = vadd.f32 %v774, %v835
      %v849 = vadd.f32 %v775, %v838
      %v850 = vadd.f32 %v776, %v841
      %v851 = vld [vmem:[%s563 + $0x1] sm:$0xff]
      %v852 = vld [vmem:[%s563 + $0x11] sm:$0xff]
      %v853 = vld [vmem:[%s563 + $0x21] sm:$0xff]
      %v854 = vld [vmem:[%s563 + $0x31] sm:$0xff]
      %v855 = vld [vmem:[%s563 + $0x41] sm:$0xff]
      %v856 = vld [vmem:[%s563 + $0x51] sm:$0xff]
      %v857 = vld [vmem:[%s563 + $0x61] sm:$0xff]
      %v858 = vld [vmem:[%s563 + $0x71] sm:$0xff]
      %s859 = scalar_lea.vmem %s2, 512
      %v860 = vld [vmem:[%s859] sm:$0xff]
      %v861 = vld [vmem:[%s859 + $0x8] sm:$0xff]
      %v862 = vld [vmem:[%s859 + $0x10] sm:$0xff]
      %v863 = vld [vmem:[%s859 + $0x18] sm:$0xff]
      %v864 = vld [vmem:[%s859 + $0x20] sm:$0xff]
      %v865 = vld [vmem:[%s859 + $0x28] sm:$0xff]
      %v866 = vld [vmem:[%s859 + $0x30] sm:$0xff]
      %v867 = vld [vmem:[%s859 + $0x38] sm:$0xff]
      %v868 = vld [vmem:[%s859 + $0x40] sm:$0xff]
      %v869 = vld [vmem:[%s859 + $0x48] sm:$0xff]
      %v870 = vld [vmem:[%s859 + $0x50] sm:$0xff]
      %v871 = vld [vmem:[%s859 + $0x58] sm:$0xff]
      %v872 = vld [vmem:[%s859 + $0x60] sm:$0xff]
      %v873 = vld [vmem:[%s859 + $0x68] sm:$0xff]
      %v874 = vld [vmem:[%s859 + $0x70] sm:$0xff]
      %v875 = vld [vmem:[%s859 + $0x78] sm:$0xff]
      %876 = vmatpush.msra.mxu0 %v875
      %877 = vmatpush.msra.mxu0 %v874
      %878 = vmatpush.msra.mxu0 %v873
      %879 = vmatpush.msra.mxu0 %v872
      %880 = vmatpush.msra.mxu0 %v871
      %881 = vmatpush.msra.mxu0 %v870
      %882 = vmatpush.msra.mxu0 %v869
      %883 = vmatpush.msra.mxu0 %v868
      %884 = vmatpush.msra.mxu0 %v867
      %885 = vmatpush.msra.mxu0 %v866
      %886 = vmatpush.msra.mxu0 %v865
      %887 = vmatpush.msra.mxu0 %v864
      %888 = vmatpush.msra.mxu0 %v863
      %889 = vmatpush.msra.mxu0 %v862
      %890 = vmatpush.msra.mxu0 %v861
      %891 = vmatpush.msra.mxu0 %v860
      %892 = vmatmul.f32.gmra.mxu0 %v851
      %v893 = vpop.f32.mrf.mxu0
      %v894 = vadd.f32 0.0, %v893
      %895 = vmatmul.f32.gmra.mxu0 %v852
      %v896 = vpop.f32.mrf.mxu0
      %v897 = vadd.f32 0.0, %v896
      %898 = vmatmul.f32.gmra.mxu0 %v853
      %v899 = vpop.f32.mrf.mxu0
      %v900 = vadd.f32 0.0, %v899
      %901 = vmatmul.f32.gmra.mxu0 %v854
      %v902 = vpop.f32.mrf.mxu0
      %v903 = vadd.f32 0.0, %v902
      %904 = vmatmul.f32.gmra.mxu0 %v855
      %v905 = vpop.f32.mrf.mxu0
      %v906 = vadd.f32 0.0, %v905
      %907 = vmatmul.f32.gmra.mxu0 %v856
      %v908 = vpop.f32.mrf.mxu0
      %v909 = vadd.f32 0.0, %v908
      %910 = vmatmul.f32.gmra.mxu0 %v857
      %v911 = vpop.f32.mrf.mxu0
      %v912 = vadd.f32 0.0, %v911
      %913 = vmatmul.f32.gmra.mxu0 %v858
      %v914 = vpop.f32.mrf.mxu0
      %v915 = vadd.f32 0.0, %v914
      %916 = vdwg.mxu0
      %v917 = vadd.f32 %v843, %v894
      %v918 = vadd.f32 %v844, %v897
      %v919 = vadd.f32 %v845, %v900
      %v920 = vadd.f32 %v846, %v903
      %v921 = vadd.f32 %v847, %v906
      %v922 = vadd.f32 %v848, %v909
      %v923 = vadd.f32 %v849, %v912
      %v924 = vadd.f32 %v850, %v915
      %v925 = vld [vmem:[%s563 + $0x2] sm:$0xff]
      %v926 = vld [vmem:[%s563 + $0x12] sm:$0xff]
      %v927 = vld [vmem:[%s563 + $0x22] sm:$0xff]
      %v928 = vld [vmem:[%s563 + $0x32] sm:$0xff]
      %v929 = vld [vmem:[%s563 + $0x42] sm:$0xff]
      %v930 = vld [vmem:[%s563 + $0x52] sm:$0xff]
      %v931 = vld [vmem:[%s563 + $0x62] sm:$0xff]
      %v932 = vld [vmem:[%s563 + $0x72] sm:$0xff]
      %s933 = scalar_lea.vmem %s2, 640
      %v934 = vld [vmem:[%s933] sm:$0xff]
      %v935 = vld [vmem:[%s933 + $0x8] sm:$0xff]
      %v936 = vld [vmem:[%s933 + $0x10] sm:$0xff]
      %v937 = vld [vmem:[%s933 + $0x18] sm:$0xff]
      %v938 = vld [vmem:[%s933 + $0x20] sm:$0xff]
      %v939 = vld [vmem:[%s933 + $0x28] sm:$0xff]
      %v940 = vld [vmem:[%s933 + $0x30] sm:$0xff]
      %v941 = vld [vmem:[%s933 + $0x38] sm:$0xff]
      %v942 = vld [vmem:[%s933 + $0x40] sm:$0xff]
      %v943 = vld [vmem:[%s933 + $0x48] sm:$0xff]
      %v944 = vld [vmem:[%s933 + $0x50] sm:$0xff]
      %v945 = vld [vmem:[%s933 + $0x58] sm:$0xff]
      %v946 = vld [vmem:[%s933 + $0x60] sm:$0xff]
      %v947 = vld [vmem:[%s933 + $0x68] sm:$0xff]
      %v948 = vld [vmem:[%s933 + $0x70] sm:$0xff]
      %v949 = vld [vmem:[%s933 + $0x78] sm:$0xff]
      %950 = vmatpush.msra.mxu0 %v949
      %951 = vmatpush.msra.mxu0 %v948
      %952 = vmatpush.msra.mxu0 %v947
      %953 = vmatpush.msra.mxu0 %v946
      %954 = vmatpush.msra.mxu0 %v945
      %955 = vmatpush.msra.mxu0 %v944
      %956 = vmatpush.msra.mxu0 %v943
      %957 = vmatpush.msra.mxu0 %v942
      %958 = vmatpush.msra.mxu0 %v941
      %959 = vmatpush.msra.mxu0 %v940
      %960 = vmatpush.msra.mxu0 %v939
      %961 = vmatpush.msra.mxu0 %v938
      %962 = vmatpush.msra.mxu0 %v937
      %963 = vmatpush.msra.mxu0 %v936
      %964 = vmatpush.msra.mxu0 %v935
      %965 = vmatpush.msra.mxu0 %v934
      %966 = vmatmul.f32.gmra.mxu0 %v925
      %v967 = vpop.f32.mrf.mxu0
      %v968 = vadd.f32 0.0, %v967
      %969 = vmatmul.f32.gmra.mxu0 %v926
      %v970 = vpop.f32.mrf.mxu0
      %v971 = vadd.f32 0.0, %v970
      %972 = vmatmul.f32.gmra.mxu0 %v927
      %v973 = vpop.f32.mrf.mxu0
      %v974 = vadd.f32 0.0, %v973
      %975 = vmatmul.f32.gmra.mxu0 %v928
      %v976 = vpop.f32.mrf.mxu0
      %v977 = vadd.f32 0.0, %v976
      %978 = vmatmul.f32.gmra.mxu0 %v929
      %v979 = vpop.f32.mrf.mxu0
      %v980 = vadd.f32 0.0, %v979
      %981 = vmatmul.f32.gmra.mxu0 %v930
      %v982 = vpop.f32.mrf.mxu0
      %v983 = vadd.f32 0.0, %v982
      %984 = vmatmul.f32.gmra.mxu0 %v931
      %v985 = vpop.f32.mrf.mxu0
      %v986 = vadd.f32 0.0, %v985
      %987 = vmatmul.f32.gmra.mxu0 %v932
      %v988 = vpop.f32.mrf.mxu0
      %v989 = vadd.f32 0.0, %v988
      %990 = vdwg.mxu0
      %v991 = vadd.f32 %v917, %v968
      %v992 = vadd.f32 %v918, %v971
      %v993 = vadd.f32 %v919, %v974
      %v994 = vadd.f32 %v920, %v977
      %v995 = vadd.f32 %v921, %v980
      %v996 = vadd.f32 %v922, %v983
      %v997 = vadd.f32 %v923, %v986
      %v998 = vadd.f32 %v924, %v989
      %s999 = scalar_lea.vmem [#allocation2], 32
      %v1000 = vld [vmem:[%s999] sm:$0xff]
      %v1001 = vld [vmem:[%s999 + $0x10] sm:$0xff]
      %v1002 = vld [vmem:[%s999 + $0x20] sm:$0xff]
      %v1003 = vld [vmem:[%s999 + $0x30] sm:$0xff]
      %v1004 = vld [vmem:[%s999 + $0x40] sm:$0xff]
      %v1005 = vld [vmem:[%s999 + $0x50] sm:$0xff]
      %v1006 = vld [vmem:[%s999 + $0x60] sm:$0xff]
      %v1007 = vld [vmem:[%s999 + $0x70] sm:$0xff]
      %s1008 = scalar_lea.vmem %s2, 768
      %v1009 = vld [vmem:[%s1008] sm:$0xff]
      %v1010 = vld [vmem:[%s1008 + $0x8] sm:$0xff]
      %v1011 = vld [vmem:[%s1008 + $0x10] sm:$0xff]
      %v1012 = vld [vmem:[%s1008 + $0x18] sm:$0xff]
      %v1013 = vld [vmem:[%s1008 + $0x20] sm:$0xff]
      %v1014 = vld [vmem:[%s1008 + $0x28] sm:$0xff]
      %v1015 = vld [vmem:[%s1008 + $0x30] sm:$0xff]
      %v1016 = vld [vmem:[%s1008 + $0x38] sm:$0xff]
      %v1017 = vld [vmem:[%s1008 + $0x40] sm:$0xff]
      %v1018 = vld [vmem:[%s1008 + $0x48] sm:$0xff]
      %v1019 = vld [vmem:[%s1008 + $0x50] sm:$0xff]
      %v1020 = vld [vmem:[%s1008 + $0x58] sm:$0xff]
      %v1021 = vld [vmem:[%s1008 + $0x60] sm:$0xff]
      %v1022 = vld [vmem:[%s1008 + $0x68] sm:$0xff]
      %v1023 = vld [vmem:[%s1008 + $0x70] sm:$0xff]
      %v1024 = vld [vmem:[%s1008 + $0x78] sm:$0xff]
      %1025 = vmatpush.msra.mxu0 %v1024
      %1026 = vmatpush.msra.mxu0 %v1023
      %1027 = vmatpush.msra.mxu0 %v1022
      %1028 = vmatpush.msra.mxu0 %v1021
      %1029 = vmatpush.msra.mxu0 %v1020
      %1030 = vmatpush.msra.mxu0 %v1019
      %1031 = vmatpush.msra.mxu0 %v1018
      %1032 = vmatpush.msra.mxu0 %v1017
      %1033 = vmatpush.msra.mxu0 %v1016
      %1034 = vmatpush.msra.mxu0 %v1015
      %1035 = vmatpush.msra.mxu0 %v1014
      %1036 = vmatpush.msra.mxu0 %v1013
      %1037 = vmatpush.msra.mxu0 %v1012
      %1038 = vmatpush.msra.mxu0 %v1011
      %1039 = vmatpush.msra.mxu0 %v1010
      %1040 = vmatpush.msra.mxu0 %v1009
      %1041 = vmatmul.f32.gmra.mxu0 %v1000
      %v1042 = vpop.f32.mrf.mxu0
      %v1043 = vadd.f32 0.0, %v1042
      %1044 = vmatmul.f32.gmra.mxu0 %v1001
      %v1045 = vpop.f32.mrf.mxu0
      %v1046 = vadd.f32 0.0, %v1045
      %1047 = vmatmul.f32.gmra.mxu0 %v1002
      %v1048 = vpop.f32.mrf.mxu0
      %v1049 = vadd.f32 0.0, %v1048
      %1050 = vmatmul.f32.gmra.mxu0 %v1003
      %v1051 = vpop.f32.mrf.mxu0
      %v1052 = vadd.f32 0.0, %v1051
      %1053 = vmatmul.f32.gmra.mxu0 %v1004
      %v1054 = vpop.f32.mrf.mxu0
      %v1055 = vadd.f32 0.0, %v1054
      %1056 = vmatmul.f32.gmra.mxu0 %v1005
      %v1057 = vpop.f32.mrf.mxu0
      %v1058 = vadd.f32 0.0, %v1057
      %1059 = vmatmul.f32.gmra.mxu0 %v1006
      %v1060 = vpop.f32.mrf.mxu0
      %v1061 = vadd.f32 0.0, %v1060
      %1062 = vmatmul.f32.gmra.mxu0 %v1007
      %v1063 = vpop.f32.mrf.mxu0
      %v1064 = vadd.f32 0.0, %v1063
      %1065 = vdwg.mxu0
      %v1066 = vadd.f32 %v991, %v1043
      %v1067 = vadd.f32 %v992, %v1046
      %v1068 = vadd.f32 %v993, %v1049
      %v1069 = vadd.f32 %v994, %v1052
      %v1070 = vadd.f32 %v995, %v1055
      %v1071 = vadd.f32 %v996, %v1058
      %v1072 = vadd.f32 %v997, %v1061
      %v1073 = vadd.f32 %v998, %v1064
      %v1074 = vld [vmem:[%s999 + $0x1] sm:$0xff]
      %v1075 = vld [vmem:[%s999 + $0x11] sm:$0xff]
      %v1076 = vld [vmem:[%s999 + $0x21] sm:$0xff]
      %v1077 = vld [vmem:[%s999 + $0x31] sm:$0xff]
      %v1078 = vld [vmem:[%s999 + $0x41] sm:$0xff]
      %v1079 = vld [vmem:[%s999 + $0x51] sm:$0xff]
      %v1080 = vld [vmem:[%s999 + $0x61] sm:$0xff]
      %v1081 = vld [vmem:[%s999 + $0x71] sm:$0xff]
      %s1082 = scalar_lea.vmem %s2, 896
      %v1083 = vld [vmem:[%s1082] sm:$0xff]
      %v1084 = vld [vmem:[%s1082 + $0x8] sm:$0xff]
      %v1085 = vld [vmem:[%s1082 + $0x10] sm:$0xff]
      %v1086 = vld [vmem:[%s1082 + $0x18] sm:$0xff]
      %v1087 = vld [vmem:[%s1082 + $0x20] sm:$0xff]
      %v1088 = vld [vmem:[%s1082 + $0x28] sm:$0xff]
      %v1089 = vld [vmem:[%s1082 + $0x30] sm:$0xff]
      %v1090 = vld [vmem:[%s1082 + $0x38] sm:$0xff]
      %v1091 = vld [vmem:[%s1082 + $0x40] sm:$0xff]
      %v1092 = vld [vmem:[%s1082 + $0x48] sm:$0xff]
      %v1093 = vld [vmem:[%s1082 + $0x50] sm:$0xff]
      %v1094 = vld [vmem:[%s1082 + $0x58] sm:$0xff]
      %v1095 = vld [vmem:[%s1082 + $0x60] sm:$0xff]
      %v1096 = vld [vmem:[%s1082 + $0x68] sm:$0xff]
      %v1097 = vld [vmem:[%s1082 + $0x70] sm:$0xff]
      %v1098 = vld [vmem:[%s1082 + $0x78] sm:$0xff]
      %1099 = vmatpush.msra.mxu0 %v1098
      %1100 = vmatpush.msra.mxu0 %v1097
      %1101 = vmatpush.msra.mxu0 %v1096
      %1102 = vmatpush.msra.mxu0 %v1095
      %1103 = vmatpush.msra.mxu0 %v1094
      %1104 = vmatpush.msra.mxu0 %v1093
      %1105 = vmatpush.msra.mxu0 %v1092
      %1106 = vmatpush.msra.mxu0 %v1091
      %1107 = vmatpush.msra.mxu0 %v1090
      %1108 = vmatpush.msra.mxu0 %v1089
      %1109 = vmatpush.msra.mxu0 %v1088
      %1110 = vmatpush.msra.mxu0 %v1087
      %1111 = vmatpush.msra.mxu0 %v1086
      %1112 = vmatpush.msra.mxu0 %v1085
      %1113 = vmatpush.msra.mxu0 %v1084
      %1114 = vmatpush.msra.mxu0 %v1083
      %1115 = vmatmul.f32.gmra.mxu0 %v1074
      %v1116 = vpop.f32.mrf.mxu0
      %v1117 = vadd.f32 0.0, %v1116
      %1118 = vmatmul.f32.gmra.mxu0 %v1075
      %v1119 = vpop.f32.mrf.mxu0
      %v1120 = vadd.f32 0.0, %v1119
      %1121 = vmatmul.f32.gmra.mxu0 %v1076
      %v1122 = vpop.f32.mrf.mxu0
      %v1123 = vadd.f32 0.0, %v1122
      %1124 = vmatmul.f32.gmra.mxu0 %v1077
      %v1125 = vpop.f32.mrf.mxu0
      %v1126 = vadd.f32 0.0, %v1125
      %1127 = vmatmul.f32.gmra.mxu0 %v1078
      %v1128 = vpop.f32.mrf.mxu0
      %v1129 = vadd.f32 0.0, %v1128
      %1130 = vmatmul.f32.gmra.mxu0 %v1079
      %v1131 = vpop.f32.mrf.mxu0
      %v1132 = vadd.f32 0.0, %v1131
      %1133 = vmatmul.f32.gmra.mxu0 %v1080
      %v1134 = vpop.f32.mrf.mxu0
      %v1135 = vadd.f32 0.0, %v1134
      %1136 = vmatmul.f32.gmra.mxu0 %v1081
      %v1137 = vpop.f32.mrf.mxu0
      %v1138 = vadd.f32 0.0, %v1137
      %1139 = vdwg.mxu0
      %v1140 = vadd.f32 %v1066, %v1117
      %v1141 = vadd.f32 %v1067, %v1120
      %v1142 = vadd.f32 %v1068, %v1123
      %v1143 = vadd.f32 %v1069, %v1126
      %v1144 = vadd.f32 %v1070, %v1129
      %v1145 = vadd.f32 %v1071, %v1132
      %v1146 = vadd.f32 %v1072, %v1135
      %v1147 = vadd.f32 %v1073, %v1138
      %v1148 = vld [vmem:[%s999 + $0x2] sm:$0xff]
      %v1149 = vld [vmem:[%s999 + $0x12] sm:$0xff]
      %v1150 = vld [vmem:[%s999 + $0x22] sm:$0xff]
      %v1151 = vld [vmem:[%s999 + $0x32] sm:$0xff]
      %v1152 = vld [vmem:[%s999 + $0x42] sm:$0xff]
      %v1153 = vld [vmem:[%s999 + $0x52] sm:$0xff]
      %v1154 = vld [vmem:[%s999 + $0x62] sm:$0xff]
      %v1155 = vld [vmem:[%s999 + $0x72] sm:$0xff]
      %s1156 = scalar_lea.vmem %s2, 1024
      %v1157 = vld [vmem:[%s1156] sm:$0xff]
      %v1158 = vld [vmem:[%s1156 + $0x8] sm:$0xff]
      %v1159 = vld [vmem:[%s1156 + $0x10] sm:$0xff]
      %v1160 = vld [vmem:[%s1156 + $0x18] sm:$0xff]
      %v1161 = vld [vmem:[%s1156 + $0x20] sm:$0xff]
      %v1162 = vld [vmem:[%s1156 + $0x28] sm:$0xff]
      %v1163 = vld [vmem:[%s1156 + $0x30] sm:$0xff]
      %v1164 = vld [vmem:[%s1156 + $0x38] sm:$0xff]
      %v1165 = vld [vmem:[%s1156 + $0x40] sm:$0xff]
      %v1166 = vld [vmem:[%s1156 + $0x48] sm:$0xff]
      %v1167 = vld [vmem:[%s1156 + $0x50] sm:$0xff]
      %v1168 = vld [vmem:[%s1156 + $0x58] sm:$0xff]
      %v1169 = vld [vmem:[%s1156 + $0x60] sm:$0xff]
      %v1170 = vld [vmem:[%s1156 + $0x68] sm:$0xff]
      %v1171 = vld [vmem:[%s1156 + $0x70] sm:$0xff]
      %v1172 = vld [vmem:[%s1156 + $0x78] sm:$0xff]
      %1173 = vmatpush.msra.mxu0 %v1172
      %1174 = vmatpush.msra.mxu0 %v1171
      %1175 = vmatpush.msra.mxu0 %v1170
      %1176 = vmatpush.msra.mxu0 %v1169
      %1177 = vmatpush.msra.mxu0 %v1168
      %1178 = vmatpush.msra.mxu0 %v1167
      %1179 = vmatpush.msra.mxu0 %v1166
      %1180 = vmatpush.msra.mxu0 %v1165
      %1181 = vmatpush.msra.mxu0 %v1164
      %1182 = vmatpush.msra.mxu0 %v1163
      %1183 = vmatpush.msra.mxu0 %v1162
      %1184 = vmatpush.msra.mxu0 %v1161
      %1185 = vmatpush.msra.mxu0 %v1160
      %1186 = vmatpush.msra.mxu0 %v1159
      %1187 = vmatpush.msra.mxu0 %v1158
      %1188 = vmatpush.msra.mxu0 %v1157
      %1189 = vmatmul.f32.gmra.mxu0 %v1148
      %v1190 = vpop.f32.mrf.mxu0
      %v1191 = vadd.f32 0.0, %v1190
      %1192 = vmatmul.f32.gmra.mxu0 %v1149
      %v1193 = vpop.f32.mrf.mxu0
      %v1194 = vadd.f32 0.0, %v1193
      %1195 = vmatmul.f32.gmra.mxu0 %v1150
      %v1196 = vpop.f32.mrf.mxu0
      %v1197 = vadd.f32 0.0, %v1196
      %1198 = vmatmul.f32.gmra.mxu0 %v1151
      %v1199 = vpop.f32.mrf.mxu0
      %v1200 = vadd.f32 0.0, %v1199
      %1201 = vmatmul.f32.gmra.mxu0 %v1152
      %v1202 = vpop.f32.mrf.mxu0
      %v1203 = vadd.f32 0.0, %v1202
      %1204 = vmatmul.f32.gmra.mxu0 %v1153
      %v1205 = vpop.f32.mrf.mxu0
      %v1206 = vadd.f32 0.0, %v1205
      %1207 = vmatmul.f32.gmra.mxu0 %v1154
      %v1208 = vpop.f32.mrf.mxu0
      %v1209 = vadd.f32 0.0, %v1208
      %1210 = vmatmul.f32.gmra.mxu0 %v1155
      %v1211 = vpop.f32.mrf.mxu0
      %v1212 = vadd.f32 0.0, %v1211
      %1213 = vdwg.mxu0
      %v1214 = vadd.f32 %v1140, %v1191
      %v1215 = vadd.f32 %v1141, %v1194
      %v1216 = vadd.f32 %v1142, %v1197
      %v1217 = vadd.f32 %v1143, %v1200
      %v1218 = vadd.f32 %v1144, %v1203
      %v1219 = vadd.f32 %v1145, %v1206
      %v1220 = vadd.f32 %v1146, %v1209
      %v1221 = vadd.f32 %v1147, %v1212
      %v1222 = vld [vmem:[%s6] sm:$0x1]
      %v1224 = vperm.slane %v1222, 0
      %v1226 = vmul.f32 %v1214, %v1224
      %v1227 = vmul.f32 %v1215, %v1224
      %v1228 = vmul.f32 %v1216, %v1224
      %v1229 = vmul.f32 %v1217, %v1224
      %v1230 = vmul.f32 %v1218, %v1224
      %v1231 = vmul.f32 %v1219, %v1224
      %v1232 = vmul.f32 %v1220, %v1224
      %v1233 = vmul.f32 %v1221, %v1224
      %v1234 = vld [vmem:[%s7] sm:$0x1]
      %v1236 = vperm.slane %v1234, 0
      %v1238 = vadd.f32 %v1226, %v1236
      %v1239 = vadd.f32 %v1227, %v1236
      %v1240 = vadd.f32 %v1228, %v1236
      %v1241 = vadd.f32 %v1229, %v1236
      %v1242 = vadd.f32 %v1230, %v1236
      %v1243 = vadd.f32 %v1231, %v1236
      %v1244 = vadd.f32 %v1232, %v1236
      %v1245 = vadd.f32 %v1233, %v1236
      %v1246 = vmax.f32 %v1238, 0.0
      %v1247 = vmax.f32 %v1239, 0.0
      %v1248 = vmax.f32 %v1240, 0.0
      %v1249 = vmax.f32 %v1241, 0.0
      %v1250 = vmax.f32 %v1242, 0.0
      %v1251 = vmax.f32 %v1243, 0.0
      %v1252 = vmax.f32 %v1244, 0.0
      %v1253 = vmax.f32 %v1245, 0.0
      %v1254 = vld [vmem:[%s3] sm:$0xff]
      %v1255 = vld [vmem:[%s3 + $0x8] sm:$0xff]
      %v1256 = vld [vmem:[%s3 + $0x10] sm:$0xff]
      %v1257 = vld [vmem:[%s3 + $0x18] sm:$0xff]
      %v1258 = vld [vmem:[%s3 + $0x20] sm:$0xff]
      %v1259 = vld [vmem:[%s3 + $0x28] sm:$0xff]
      %v1260 = vld [vmem:[%s3 + $0x30] sm:$0xff]
      %v1261 = vld [vmem:[%s3 + $0x38] sm:$0xff]
      %v1262 = vld [vmem:[%s3 + $0x40] sm:$0xff]
      %v1263 = vld [vmem:[%s3 + $0x48] sm:$0xff]
      %v1264 = vld [vmem:[%s3 + $0x50] sm:$0xff]
      %v1265 = vld [vmem:[%s3 + $0x58] sm:$0xff]
      %v1266 = vld [vmem:[%s3 + $0x60] sm:$0xff]
      %v1267 = vld [vmem:[%s3 + $0x68] sm:$0xff]
      %v1268 = vld [vmem:[%s3 + $0x70] sm:$0xff]
      %v1269 = vld [vmem:[%s3 + $0x78] sm:$0xff]
      %1270 = vmatpush.msra.mxu0 %v1269
      %1271 = vmatpush.msra.mxu0 %v1268
      %1272 = vmatpush.msra.mxu0 %v1267
      %1273 = vmatpush.msra.mxu0 %v1266
      %1274 = vmatpush.msra.mxu0 %v1265
      %1275 = vmatpush.msra.mxu0 %v1264
      %1276 = vmatpush.msra.mxu0 %v1263
      %1277 = vmatpush.msra.mxu0 %v1262
      %1278 = vmatpush.msra.mxu0 %v1261
      %1279 = vmatpush.msra.mxu0 %v1260
      %1280 = vmatpush.msra.mxu0 %v1259
      %1281 = vmatpush.msra.mxu0 %v1258
      %1282 = vmatpush.msra.mxu0 %v1257
      %1283 = vmatpush.msra.mxu0 %v1256
      %1284 = vmatpush.msra.mxu0 %v1255
      %1285 = vmatpush.msra.mxu0 %v1254
      %1286 = vmatmul.f32.gmra.mxu0 %v1246
      %v1287 = vpop.f32.mrf.mxu0
      %v1288 = vadd.f32 0.0, %v1287
      %1289 = vmatmul.f32.gmra.mxu0 %v1247
      %v1290 = vpop.f32.mrf.mxu0
      %v1291 = vadd.f32 0.0, %v1290
      %1292 = vmatmul.f32.gmra.mxu0 %v1248
      %v1293 = vpop.f32.mrf.mxu0
      %v1294 = vadd.f32 0.0, %v1293
      %1295 = vmatmul.f32.gmra.mxu0 %v1249
      %v1296 = vpop.f32.mrf.mxu0
      %v1297 = vadd.f32 0.0, %v1296
      %1298 = vmatmul.f32.gmra.mxu0 %v1250
      %v1299 = vpop.f32.mrf.mxu0
      %v1300 = vadd.f32 0.0, %v1299
      %1301 = vmatmul.f32.gmra.mxu0 %v1251
      %v1302 = vpop.f32.mrf.mxu0
      %v1303 = vadd.f32 0.0, %v1302
      %1304 = vmatmul.f32.gmra.mxu0 %v1252
      %v1305 = vpop.f32.mrf.mxu0
      %v1306 = vadd.f32 0.0, %v1305
      %1307 = vmatmul.f32.gmra.mxu0 %v1253
      %v1308 = vpop.f32.mrf.mxu0
      %v1309 = vadd.f32 0.0, %v1308
      %1310 = vdwg.mxu0
      %v1311 = vld [vmem:[%s8] sm:$0x1]
      %v1313 = vperm.slane %v1311, 0
      %v1315 = vmul.f32 %v1288, %v1313
      %v1316 = vmul.f32 %v1291, %v1313
      %v1317 = vmul.f32 %v1294, %v1313
      %v1318 = vmul.f32 %v1297, %v1313
      %v1319 = vmul.f32 %v1300, %v1313
      %v1320 = vmul.f32 %v1303, %v1313
      %v1321 = vmul.f32 %v1306, %v1313
      %v1322 = vmul.f32 %v1309, %v1313
      %v1323 = vld [vmem:[%s9] sm:$0x1]
      %v1325 = vperm.slane %v1323, 0
      %v1327 = vadd.f32 %v1315, %v1325
      %v1328 = vadd.f32 %v1316, %v1325
      %v1329 = vadd.f32 %v1317, %v1325
      %v1330 = vadd.f32 %v1318, %v1325
      %v1331 = vadd.f32 %v1319, %v1325
      %v1332 = vadd.f32 %v1320, %v1325
      %v1333 = vadd.f32 %v1321, %v1325
      %v1334 = vadd.f32 %v1322, %v1325
      %v1335 = vadd.f32 %v519, %v1327
      %v1336 = vadd.f32 %v521, %v1328
      %v1337 = vadd.f32 %v523, %v1329
      %v1338 = vadd.f32 %v525, %v1330
      %v1339 = vadd.f32 %v527, %v1331
      %v1340 = vadd.f32 %v529, %v1332
      %v1341 = vadd.f32 %v531, %v1333
      %v1342 = vadd.f32 %v533, %v1334
      %v1343 = vmax.f32 %v1335, 0.0
      %v1344 = vmax.f32 %v1336, 0.0
      %v1345 = vmax.f32 %v1337, 0.0
      %v1346 = vmax.f32 %v1338, 0.0
      %v1347 = vmax.f32 %v1339, 0.0
      %v1348 = vmax.f32 %v1340, 0.0
      %v1349 = vmax.f32 %v1341, 0.0
      %v1350 = vmax.f32 %v1342, 0.0
      %1351 = vst [vmem:[%s359] sm:$0xff] %v1343
      %1352 = vst [vmem:[%s359 + $0x8] sm:$0xff] %v1344
      %1353 = vst [vmem:[%s359 + $0x10] sm:$0xff] %v1345
      %1354 = vst [vmem:[%s359 + $0x18] sm:$0xff] %v1346
      %1355 = vst [vmem:[%s359 + $0x20] sm:$0xff] %v1347
      %1356 = vst [vmem:[%s359 + $0x28] sm:$0xff] %v1348
      %1357 = vst [vmem:[%s359 + $0x30] sm:$0xff] %v1349
      %1358 = vst [vmem:[%s359 + $0x38] sm:$0xff] %v1350
      %p1359 = scmp.lt.s32.totalorder %s21, 1
      %s1360 = scalar_select %p1359, %s21, 1
      %s1361 = smul.addr %s1360, 8
      %s1362 = smul.addr %s1361, 8
      %s1363 = scalar_lea.vmem %s10, %s1362
      // Predicated region
      $region61: #{res_bottleneck_block.1} parent=59 // pred_check
        %p1364 = pneg %p254
      $region62: #{res_bottleneck_block.1} parent=59 // pred_check_branch
        %1366 = sbr.rel (%p1364) target = $region64
      $region63: #{res_bottleneck_block.1} parent=59 // pred_region
        _
      $region64: #{res_bottleneck_block.1} parent=59 // pred_fallthru
        _
    $region60: #{res_bottleneck_block.1} parent=5 // pred_fallthru
      _
    %p1367 = scmp.le.s32.totalorder 2, %s16
    // Predicated region
    $region65: #{res_bottleneck_block.1} parent=5 // pred_check
      %p1368 = pneg %p1367
    $region66: #{res_bottleneck_block.1} parent=5 // pred_check_branch
      %1370 = sbr.rel (%p1368) target = $region68
    $region67: #{res_bottleneck_block.1} parent=5 // pred_region
      %s1371 = ssub.s32 %s16, 2
      // Predicated region
      $region69: #{res_bottleneck_block.1} parent=67 // pred_check
        %p1372 = pneg %p260
      $region70: #{res_bottleneck_block.1} parent=67 // pred_check_branch
        %1374 = sbr.rel (%p1372) target = $region72
      $region71: #{res_bottleneck_block.1} parent=67 // pred_region
        %p1375 = scmp.lt.s32.totalorder %s22, 1
        %s1376 = scalar_select %p1375, %s22, 1
        %s1377 = smul.addr %s1376, 8
        %s1378 = smul.addr %s1377, 8
        %s1379 = scalar_lea.vmem %s10, %s1378
      $region72: #{res_bottleneck_block.1} parent=67 // pred_fallthru
        _
    $region68: #{res_bottleneck_block.1} parent=5 // pred_fallthru
      _
  $region6: #{res_bottleneck_block.1} parent=0 // loop_footer
    %s20 = sadd.s32 1, %s16
  $region7: #{res_bottleneck_block.1} parent=0 // loop_footer_branch
    %15 = sbr.rel target = $region3
  $region8: #{res_bottleneck_block.1} parent=0 // loop_exit
    _

</llo_original>
